<compile_context>
chip_gen: v7x
topology: tpu7x:2x2x1
jax: 0.10.0
libtpu: 0.0.40
codegen_flags: <defaults>
</compile_context>

<pallas_src>
import functools

import jax
import jax.numpy as jnp
from jax.experimental import pallas as pl
from jax.experimental.pallas import tpu as pltpu

_BN_EPS = 1e-5
_MXU_DTYPE = jnp.bfloat16   # native MXU input dtype on v5e/v6e/v7x; accumulation stays f32


def _tap(d, s):
    """Polyphase mapping for kernel offset d in {0,1,2} of a 3x3, pad-1, stride-s conv.

    Returns (phase, start): the tap reads rows [start : start + Ho] of the zero-left-padded
    phase-`phase` plane (rows congruent to `phase` mod s) of the activated input.
    """
    return (d - 1) % s, 1 + (d - 1) // s


@functools.lru_cache(maxsize=None)
def _vmem_limit_bytes():
    # Size the scoped-VMEM limit from the actual chip instead of hardcoding 32 MiB:
    # ~100 MiB on v5e/v6e (128 MiB physical), ~54 MiB on v7x (64 MiB physical per core).
    try:
        cap = int(pltpu.get_tpu_info().vmem_capacity_bytes)
    except Exception:
        cap = 64 * 1024 * 1024
    return min(int(cap * 0.85), 100 * 1024 * 1024)


def _make_preact_conv_kernel(stride, residual_kind, emit_stats):
    """BN-affine + ReLU + 3x3 'same' conv (stride) as ONE im2col matmul [+ fused residual].

    residual_kind: "none" | "identity" (add same-shape bf16 tensor)
                 | "downsample" (BN-affine + ReLU + 1x1 conv of a second input, folded into
                    the same matmul as extra K columns)
    emit_stats: also emit per-image (sum, sum_of_squares) of the f32 conv output so the
                caller can finish the next BatchNorm's batch statistics without re-reading
                the output from HBM.
    """
    P = stride * stride

    def kernel(*refs):
        xph_ref, s_ref, b_ref, w_ref = refs[:4]
        i = 4
        if residual_kind == "identity":
            r_ref = refs[i]; i += 1
        elif residual_kind == "downsample":
            xs_ref, sd_ref, bd_ref = refs[i], refs[i + 1], refs[i + 2]; i += 3
        o_ref = refs[i]; i += 1
        if emit_stats:
            stats_ref = refs[i]; i += 1
        pad_ref, col_ref = refs[i], refs[i + 1]

        _, _, Hs, Ws, Cin = xph_ref.shape
        _, Ho, Wo, Cout = o_ref.shape
        pad_h, pad_w = pad_ref.shape[1], pad_ref.shape[2]
        Ktot = col_ref.shape[-1]
        K9 = 9 * Cin

        # ---- pre-activation: per-channel affine + ReLU, one phase at a time ----
        s = s_ref[...]            # (1, Cin) f32, hoisted out of the phase loop
        b = b_ref[...]
        zrow = jnp.zeros((1, pad_w, Cin), _MXU_DTYPE)
        zcol = jnp.zeros((pad_h, 1, Cin), _MXU_DTYPE)
        for ph in range(P):
            a = jnp.maximum(xph_ref[0, ph].astype(jnp.float32) * s + b, 0.0)
            a = a.astype(_MXU_DTYPE)
            # Zero 1-element borders + interior, every grid step (megacore-safe: each core
            # owns its own scratch; no reliance on a "first iteration" init).
            pad_ref[ph, 0:1, :, :] = zrow
            pad_ref[ph, :, 0:1, :] = zcol
            if stride == 1:
                pad_ref[ph, Hs + 1:Hs + 2, :, :] = zrow
                pad_ref[ph, :, Ws + 1:Ws + 2, :] = zcol
            pad_ref[ph, 1:Hs + 1, 1:Ws + 1, :] = a

        # ---- im2col: gather the 9 taps into contiguous K columns of the col scratch ----
        for dy in range(3):
            rp, r0 = _tap(dy, stride)
            for dx in range(3):
                cp, c0 = _tap(dx, stride)
                t = dy * 3 + dx
                col_ref[:, :, t * Cin:(t + 1) * Cin] = (
                    pad_ref[rp * stride + cp, r0:r0 + Ho, c0:c0 + Wo, :])

        # ---- fused downsample branch: its activated input becomes extra K columns ----
        if residual_kind == "downsample":
            Cd = xs_ref.shape[-1]
            rr = jnp.maximum(xs_ref[0].astype(jnp.float32) * sd_ref[...] + bd_ref[...], 0.0)
            col_ref[:, :, K9:K9 + Cd] = rr.astype(_MXU_DTYPE)

        # ---- one big-K MXU matmul (K = 9*Cin [+ Cd]); accumulation stays inside the MXU ----
        acc = jnp.dot(col_ref[...].reshape(Ho * Wo, Ktot), w_ref[...],
                      preferred_element_type=jnp.float32)       # (Ho*Wo, Cout) f32

        if emit_stats:
            stats_ref[0, 0:1, :] = jnp.sum(acc, axis=0, keepdims=True)
            stats_ref[0, 1:2, :] = jnp.sum(acc * acc, axis=0, keepdims=True)

        out = acc.reshape(Ho, Wo, Cout)
        if residual_kind == "identity":
            out = out + r_ref[0].astype(jnp.float32)
        o_ref[0] = out.astype(o_ref.dtype)

    return kernel


# ---------------------------------------------------------------------------
# pallas_call wrapper
# ---------------------------------------------------------------------------
def _to_phases(x, stride):
    """(N,H,W,C) -> (N, stride*stride, H//stride, W//stride, C) polyphase split (pure layout)."""
    N, H, W, C = x.shape
    if stride == 1:
        return x[:, None]
    Hs, Ws = H // stride, W // stride
    xr = x.reshape(N, Hs, stride, Ws, stride, C).transpose(0, 2, 4, 1, 3, 5)
    return xr.reshape(N, stride * stride, Hs, Ws, C)


def preact_conv3x3(xph, scale, bias, w_flat, *, stride, out_dtype=jnp.float32,
                   residual_kind="none", res_args=(), emit_stats=False):
    """relu(x*scale+bias) -> 3x3 'same' conv with `stride` [+ fused residual] [+ BN stats].

    xph:    (N, stride**2, Ho, Wo, Cin) bf16 polyphase-split input.
    w_flat: (9*Cin, Cout) bf16 for "none"/"identity"; (9*Cin + Cd, Cout) for "downsample"
            (3x3 weight rows first in (dy, dx, c) order, then the 1x1 downsample weight).
      residual_kind "none":       res_args = ()
      residual_kind "identity":   res_args = (residual,)      residual (N, Ho, Wo, Cout) bf16
      residual_kind "downsample": res_args = (xs, sd, bd)     xs (N, Ho, Wo, Cd) bf16
    Returns the conv output, plus a (N, 2, Cout) f32 [sum, sum_sq] tensor if emit_stats.
    """
    N, P, Hs, Ws, Cin = xph.shape
    assert P == stride * stride
    Ktot, Cout = w_flat.shape
    Ho, Wo = Hs, Ws
    pad_hi = 1 if stride == 1 else 0
    pad_h, pad_w = Ho + 1 + pad_hi, Wo + 1 + pad_hi

    args = [xph.astype(_MXU_DTYPE),
            scale.reshape(1, Cin).astype(jnp.float32),
            bias.reshape(1, Cin).astype(jnp.float32),
            w_flat.astype(_MXU_DTYPE)]
    in_specs = [
        pl.BlockSpec((1, P, Hs, Ws, Cin), lambda n: (n, 0, 0, 0, 0)),
        pl.BlockSpec((1, Cin), lambda n: (0, 0)),
        pl.BlockSpec((1, Cin), lambda n: (0, 0)),
        pl.BlockSpec((Ktot, Cout), lambda n: (0, 0)),
    ]

    if residual_kind == "identity":
        (r,) = res_args
        assert Ktot == 9 * Cin
        args.append(r.astype(_MXU_DTYPE))
        in_specs.append(pl.BlockSpec((1, Ho, Wo, Cout), lambda n: (n, 0, 0, 0)))
    elif residual_kind == "downsample":
        xs, sd, bd = res_args
        Cd = xs.shape[-1]
        assert Ktot == 9 * Cin + Cd
        args += [xs.astype(_MXU_DTYPE),
                 sd.reshape(1, Cd).astype(jnp.float32),
                 bd.reshape(1, Cd).astype(jnp.float32)]
        in_specs += [
            pl.BlockSpec((1, Ho, Wo, Cd), lambda n: (n, 0, 0, 0)),
            pl.BlockSpec((1, Cd), lambda n: (0, 0)),
            pl.BlockSpec((1, Cd), lambda n: (0, 0)),
        ]
    else:
        assert Ktot == 9 * Cin

    main_shape = jax.ShapeDtypeStruct((N, Ho, Wo, Cout), out_dtype)
    main_spec = pl.BlockSpec((1, Ho, Wo, Cout), lambda n: (n, 0, 0, 0))
    if emit_stats:
        out_shape = (main_shape, jax.ShapeDtypeStruct((N, 2, Cout), jnp.float32))
        out_specs = (main_spec, pl.BlockSpec((1, 2, Cout), lambda n: (n, 0, 0)))
    else:
        out_shape = main_shape
        out_specs = main_spec

    return pl.pallas_call(
        _make_preact_conv_kernel(stride, residual_kind, emit_stats),
        out_shape=out_shape,
        grid_spec=pltpu.PrefetchScalarGridSpec(
            num_scalar_prefetch=0,
            grid=(N,),
            in_specs=in_specs,
            out_specs=out_specs,
            scratch_shapes=[pltpu.VMEM((P, pad_h, pad_w, Cin), _MXU_DTYPE),   # padded act
                            pltpu.VMEM((Ho, Wo, Ktot), _MXU_DTYPE)],          # im2col
        ),
        compiler_params=pltpu.CompilerParams(
            dimension_semantics=("parallel",),
            vmem_limit_bytes=_vmem_limit_bytes(),
        ),
    )(*args)


# ---------------------------------------------------------------------------
# Module forward
# ---------------------------------------------------------------------------
def _bn_fold(x_nhwc, gamma, beta, eps=_BN_EPS):
    # Training-mode BatchNorm2d: batch statistics over (N, H, W), biased variance,
    # folded into a per-channel (scale, bias) affine applied in-kernel.
    mean = jnp.mean(x_nhwc, axis=(0, 1, 2))
    var = jnp.mean(jnp.square(x_nhwc - mean), axis=(0, 1, 2))
    inv = gamma / jnp.sqrt(var + eps)
    return inv, beta - mean * inv


def preact_basic_block(x_nchw, params, stride, has_downsample):
    x = jnp.transpose(x_nchw, (0, 2, 3, 1)).astype(jnp.float32)   # NCHW -> NHWC
    N, H, W, Cin = x.shape
    Cout = params["w1"].shape[-1]
    assert H % stride == 0 and W % stride == 0
    Ho, Wo = H // stride, W // stride

    # BN1 (and BNd) batch statistics on the f32 input (cheap XLA reduction); the folded
    # affine runs inside the kernels.
    s1, b1 = _bn_fold(x, params["bn1_gamma"], params["bn1_beta"])

    # One bf16 polyphase re-layout of x feeds conv1; its phase 0 (== x[:, ::s, ::s, :]) is
    # reused as the downsample input / identity residual -> no second pass over x in HBM.
    xph1 = _to_phases(x.astype(_MXU_DTYPE), stride)
    w1f = params["w1"].reshape(9 * Cin, Cout).astype(_MXU_DTYPE)

    # conv1 also emits per-image partial sums so BN2 stats don't re-read y1 from HBM.
    y1, stats = preact_conv3x3(xph1, s1, b1, w1f, stride=stride,
                               out_dtype=_MXU_DTYPE, emit_stats=True)

    tot = jnp.sum(stats, axis=0)                        # (2, Cout) f32
    cnt = N * Ho * Wo
    mean2 = tot[0] / cnt
    var2 = jnp.maximum(tot[1] / cnt - mean2 * mean2, 0.0)
    inv2 = params["bn2_gamma"] / jnp.sqrt(var2 + _BN_EPS)
    s2, b2 = inv2, params["bn2_beta"] - mean2 * inv2

    y1ph = y1[:, None]                                  # stride-1 polyphase: pure new axis
    w2f = params["w2"].reshape(9 * Cout, Cout).astype(_MXU_DTYPE)

    if has_downsample:
        sd, bd = _bn_fold(x, params["bnd_gamma"], params["bnd_beta"])
        xs = xph1[:, 0]                                 # == x[:, ::s, ::s, :], already bf16
        wd = params["wd"].astype(_MXU_DTYPE)            # (Cin, Cout)
        w2full = jnp.concatenate([w2f, wd], axis=0)     # fold the 1x1 conv into the big-K matmul
        out = preact_conv3x3(y1ph, s2, b2, w2full, stride=1, out_dtype=jnp.float32,
                             residual_kind="downsample", res_args=(xs, sd, bd))
    else:
        assert stride == 1 and Cin == Cout, "identity residual requires matching shapes"
        res = xph1[:, 0]                                # == x (bf16), reused, no extra pass
        out = preact_conv3x3(y1ph, s2, b2, w2f, stride=1, out_dtype=jnp.float32,
                             residual_kind="identity", res_args=(res,))
    return jnp.transpose(out, (0, 3, 1, 2))             # NHWC -> NCHW


# ---------------------------------------------------------------------------
# Pure-JAX reference (mirrors the PyTorch forward, NCHW, f32) and deterministic params
# ---------------------------------------------------------------------------
def _reference(x_nchw, params, stride, has_downsample, eps=_BN_EPS):
    def bn_relu(x, g, b):
        mean = jnp.mean(x, axis=(0, 2, 3), keepdims=True)
        var = jnp.mean(jnp.square(x - mean), axis=(0, 2, 3), keepdims=True)
        y = (x - mean) / jnp.sqrt(var + eps) * g.reshape(1, -1, 1, 1) + b.reshape(1, -1, 1, 1)
        return jnp.maximum(y, 0.0)

    def conv(x, w_hwio, s, pad):
        return jax.lax.conv_general_dilated(
            x, w_hwio, (s, s), pad, dimension_numbers=("NCHW", "HWIO", "NCHW"))

    out = conv(bn_relu(x_nchw, params["bn1_gamma"], params["bn1_beta"]),
               params["w1"], stride, [(1, 1), (1, 1)])
    out = conv(bn_relu(out, params["bn2_gamma"], params["bn2_beta"]),
               params["w2"], 1, [(1, 1), (1, 1)])
    if has_downsample:
        res = conv(bn_relu(x_nchw, params["bnd_gamma"], params["bnd_beta"]),
                   params["wd"].reshape(1, 1, *params["wd"].shape),
                   stride, [(0, 0), (0, 0)])
    else:
        res = x_nchw
    return out + res


def _make_params(key, cin, cout, has_downsample):
    ks = jax.random.split(key, 9)
    p = {
        "bn1_gamma": 1.0 + 0.1 * jax.random.normal(ks[0], (cin,), jnp.float32),
        "bn1_beta": 0.1 * jax.random.normal(ks[1], (cin,), jnp.float32),
        "w1": 0.1 * jax.random.normal(ks[2], (3, 3, cin, cout), jnp.float32),
        "bn2_gamma": 1.0 + 0.1 * jax.random.normal(ks[3], (cout,), jnp.float32),
        "bn2_beta": 0.1 * jax.random.normal(ks[4], (cout,), jnp.float32),
        "w2": 0.1 * jax.random.normal(ks[5], (3, 3, cout, cout), jnp.float32),
    }
    if has_downsample:
        p["bnd_gamma"] = 1.0 + 0.1 * jax.random.normal(ks[6], (cin,), jnp.float32)
        p["bnd_beta"] = 0.1 * jax.random.normal(ks[7], (cin,), jnp.float32)
        p["wd"] = 0.1 * jax.random.normal(ks[8], (cin, cout), jnp.float32)
    return p


if __name__ == "__main__":
    key = jax.random.PRNGKey(0)
    kx, kp1, kp2 = jax.random.split(key, 3)

    N, Cin, H, W = 2, 4, 16, 16
    x = jax.random.normal(kx, (N, Cin, H, W), jnp.float32)   # NCHW, like PyTorch

    # bf16 activations / weights in and out of the MXU (f32 accumulation), bf16 y1 and
    # residual HBM I/O -> tolerance at bf16 level vs the pure-f32 reference.
    ATOL = RTOL = 3e-2

    # Case 1: stride=2 with downsample branch (BN -> ReLU -> 1x1 conv, stride 2), fully fused.
    p1 = _make_params(kp1, Cin, 8, has_downsample=True)
    out1 = jax.block_until_ready(preact_basic_block(x, p1, stride=2, has_downsample=True))
    ref1 = _reference(x, p1, 2, True)
    assert out1.shape == (N, 8, H // 2, W // 2), out1.shape
    assert jnp.allclose(out1, ref1, atol=ATOL, rtol=RTOL), float(jnp.max(jnp.abs(out1 - ref1)))

    # Case 2: stride=1, identity residual (downsample=None).
    p2 = _make_params(kp2, Cin, Cin, has_downsample=False)
    out2 = jax.block_until_ready(preact_basic_block(x, p2, stride=1, has_downsample=False))
    ref2 = _reference(x, p2, 1, False)
    assert out2.shape == (N, Cin, H, W), out2.shape
    assert jnp.allclose(out2, ref2, atol=ATOL, rtol=RTOL), float(jnp.max(jnp.abs(out2 - ref2)))

    print("KERNEL_OK")
</pallas_src>

<mosaic_0001>
module attributes {stable_mosaic.version = 11 : i64} {
  func.func @kernel(%arg0: i32, %arg1: memref<1x4x8x8x4xbf16, #tpu.memory_space<vmem>>, %arg2: memref<1x4xf32, #tpu.memory_space<vmem>>, %arg3: memref<1x4xf32, #tpu.memory_space<vmem>>, %arg4: memref<36x8xbf16, #tpu.memory_space<vmem>>, %arg5: memref<1x8x8x8xbf16, #tpu.memory_space<vmem>>, %arg6: memref<1x2x8xf32, #tpu.memory_space<vmem>>, %arg7: memref<4x9x9x4xbf16, #tpu.memory_space<vmem>>, %arg8: memref<8x8x36xbf16, #tpu.memory_space<vmem>>) attributes {dimension_semantics = [#tpu.dimension_semantics<parallel>], iteration_bounds = array<i64: 2>, scalar_prefetch = 0 : i64, scratch_operands = 2 : i64, tpu.core_type = #tpu.core_type<tc>, window_params = [{transform_indices = @transform_0, window_bounds = array<i64: 1, 4, 8, 8, 4>}, {pipeline_mode = #tpu.pipeline_mode<synchronous>, transform_indices = @transform_1, window_bounds = array<i64: 1, 4>}, {pipeline_mode = #tpu.pipeline_mode<synchronous>, transform_indices = @transform_2, window_bounds = array<i64: 1, 4>}, {pipeline_mode = #tpu.pipeline_mode<synchronous>, transform_indices = @transform_3, window_bounds = array<i64: 36, 8>}, {transform_indices = @transform_4, window_bounds = array<i64: 1, 8, 8, 8>}, {transform_indices = @transform_5, window_bounds = array<i64: 1, 2, 8>}]} {
    %c0 = arith.constant 0 : index
    %c0_0 = arith.constant 0 : index
    %0 = vector.load %arg2[%c0, %c0_0] : memref<1x4xf32, #tpu.memory_space<vmem>>, vector<1x4xf32>
    %c0_1 = arith.constant 0 : index
    %c0_2 = arith.constant 0 : index
    %1 = vector.load %arg3[%c0_1, %c0_2] : memref<1x4xf32, #tpu.memory_space<vmem>>, vector<1x4xf32>
    %cst = arith.constant 0.000000e+00 : bf16
    %2 = vector.broadcast %cst : bf16 to vector<1x9x4xbf16>
    %cst_3 = arith.constant 0.000000e+00 : bf16
    %3 = vector.broadcast %cst_3 : bf16 to vector<9x1x4xbf16>
    %c0_4 = arith.constant 0 : index
    %c0_5 = arith.constant 0 : index
    %c0_6 = arith.constant 0 : index
    %c0_7 = arith.constant 0 : index
    %c0_8 = arith.constant 0 : index
    %4 = vector.load %arg1[%c0_4, %c0_5, %c0_6, %c0_7, %c0_8] : memref<1x4x8x8x4xbf16, #tpu.memory_space<vmem>>, vector<1x1x8x8x4xbf16>
    %5 = vector.shape_cast %4 : vector<1x1x8x8x4xbf16> to vector<8x8x4xbf16>
    %6 = arith.extf %5 : vector<8x8x4xbf16> to vector<8x8x4xf32>
    %7 = vector.shape_cast %0 : vector<1x4xf32> to vector<1x1x4xf32>
    %8 = vector.broadcast %7 : vector<1x1x4xf32> to vector<8x8x4xf32>
    %9 = arith.mulf %6, %8 : vector<8x8x4xf32>
    %10 = vector.shape_cast %1 : vector<1x4xf32> to vector<1x1x4xf32>
    %11 = vector.broadcast %10 : vector<1x1x4xf32> to vector<8x8x4xf32>
    %12 = arith.addf %9, %11 : vector<8x8x4xf32>
    %cst_9 = arith.constant 0.000000e+00 : f32
    %13 = vector.broadcast %cst_9 : f32 to vector<8x8x4xf32>
    %14 = arith.maximumf %12, %13 : vector<8x8x4xf32>
    %15 = arith.truncf %14 : vector<8x8x4xf32> to vector<8x8x4xbf16>
    %c0_10 = arith.constant 0 : index
    %c0_11 = arith.constant 0 : index
    %c0_12 = arith.constant 0 : index
    %c0_13 = arith.constant 0 : index
    %16 = vector.load %arg7[%c0_10, %c0_11, %c0_12, %c0_13] : memref<4x9x9x4xbf16, #tpu.memory_space<vmem>>, vector<1x1x9x4xbf16>
    %17 = vector.shape_cast %16 : vector<1x1x9x4xbf16> to vector<1x9x4xbf16>
    %18 = vector.shape_cast %2 : vector<1x9x4xbf16> to vector<1x1x9x4xbf16>
    tpu.vector_store %arg7[%c0_10, %c0_11, %c0_12, %c0_13], %18 {strides = array<i32>} : memref<4x9x9x4xbf16, #tpu.memory_space<vmem>>, vector<1x1x9x4xbf16>,
    %c0_14 = arith.constant 0 : index
    %c0_15 = arith.constant 0 : index
    %c0_16 = arith.constant 0 : index
    %c0_17 = arith.constant 0 : index
    %19 = vector.load %arg7[%c0_14, %c0_15, %c0_16, %c0_17] : memref<4x9x9x4xbf16, #tpu.memory_space<vmem>>, vector<1x9x1x4xbf16>
    %20 = vector.shape_cast %19 : vector<1x9x1x4xbf16> to vector<9x1x4xbf16>
    %21 = vector.shape_cast %3 : vector<9x1x4xbf16> to vector<1x9x1x4xbf16>
    tpu.vector_store %arg7[%c0_14, %c0_15, %c0_16, %c0_17], %21 {strides = array<i32>} : memref<4x9x9x4xbf16, #tpu.memory_space<vmem>>, vector<1x9x1x4xbf16>,
    %c0_18 = arith.constant 0 : index
    %c1 = arith.constant 1 : index
    %c1_19 = arith.constant 1 : index
    %c0_20 = arith.constant 0 : index
    %22 = vector.load %arg7[%c0_18, %c1, %c1_19, %c0_20] : memref<4x9x9x4xbf16, #tpu.memory_space<vmem>>, vector<1x8x8x4xbf16>
    %23 = vector.shape_cast %22 : vector<1x8x8x4xbf16> to vector<8x8x4xbf16>
    %24 = vector.shape_cast %15 : vector<8x8x4xbf16> to vector<1x8x8x4xbf16>
    tpu.vector_store %arg7[%c0_18, %c1, %c1_19, %c0_20], %24 {strides = array<i32>} : memref<4x9x9x4xbf16, #tpu.memory_space<vmem>>, vector<1x8x8x4xbf16>,
    %c0_21 = arith.constant 0 : index
    %c1_22 = arith.constant 1 : index
    %c0_23 = arith.constant 0 : index
    %c0_24 = arith.constant 0 : index
    %c0_25 = arith.constant 0 : index
    %25 = vector.load %arg1[%c0_21, %c1_22, %c0_23, %c0_24, %c0_25] : memref<1x4x8x8x4xbf16, #tpu.memory_space<vmem>>, vector<1x1x8x8x4xbf16>
    %26 = vector.shape_cast %25 : vector<1x1x8x8x4xbf16> to vector<8x8x4xbf16>
    %27 = arith.extf %26 : vector<8x8x4xbf16> to vector<8x8x4xf32>
    %28 = vector.shape_cast %0 : vector<1x4xf32> to vector<1x1x4xf32>
    %29 = vector.broadcast %28 : vector<1x1x4xf32> to vector<8x8x4xf32>
    %30 = arith.mulf %27, %29 : vector<8x8x4xf32>
    %31 = vector.shape_cast %1 : vector<1x4xf32> to vector<1x1x4xf32>
    %32 = vector.broadcast %31 : vector<1x1x4xf32> to vector<8x8x4xf32>
    %33 = arith.addf %30, %32 : vector<8x8x4xf32>
    %cst_26 = arith.constant 0.000000e+00 : f32
    %34 = vector.broadcast %cst_26 : f32 to vector<8x8x4xf32>
    %35 = arith.maximumf %33, %34 : vector<8x8x4xf32>
    %36 = arith.truncf %35 : vector<8x8x4xf32> to vector<8x8x4xbf16>
    %c1_27 = arith.constant 1 : index
    %c0_28 = arith.constant 0 : index
    %c0_29 = arith.constant 0 : index
    %c0_30 = arith.constant 0 : index
    %37 = vector.load %arg7[%c1_27, %c0_28, %c0_29, %c0_30] : memref<4x9x9x4xbf16, #tpu.memory_space<vmem>>, vector<1x1x9x4xbf16>
    %38 = vector.shape_cast %37 : vector<1x1x9x4xbf16> to vector<1x9x4xbf16>
    %39 = vector.shape_cast %2 : vector<1x9x4xbf16> to vector<1x1x9x4xbf16>
    tpu.vector_store %arg7[%c1_27, %c0_28, %c0_29, %c0_30], %39 {strides = array<i32>} : memref<4x9x9x4xbf16, #tpu.memory_space<vmem>>, vector<1x1x9x4xbf16>,
    %c1_31 = arith.constant 1 : index
    %c0_32 = arith.constant 0 : index
    %c0_33 = arith.constant 0 : index
    %c0_34 = arith.constant 0 : index
    %40 = vector.load %arg7[%c1_31, %c0_32, %c0_33, %c0_34] : memref<4x9x9x4xbf16, #tpu.memory_space<vmem>>, vector<1x9x1x4xbf16>
    %41 = vector.shape_cast %40 : vector<1x9x1x4xbf16> to vector<9x1x4xbf16>
    %42 = vector.shape_cast %3 : vector<9x1x4xbf16> to vector<1x9x1x4xbf16>
    tpu.vector_store %arg7[%c1_31, %c0_32, %c0_33, %c0_34], %42 {strides = array<i32>} : memref<4x9x9x4xbf16, #tpu.memory_space<vmem>>, vector<1x9x1x4xbf16>,
    %c1_35 = arith.constant 1 : index
    %c1_36 = arith.constant 1 : index
    %c1_37 = arith.constant 1 : index
    %c0_38 = arith.constant 0 : index
    %43 = vector.load %arg7[%c1_35, %c1_36, %c1_37, %c0_38] : memref<4x9x9x4xbf16, #tpu.memory_space<vmem>>, vector<1x8x8x4xbf16>
    %44 = vector.shape_cast %43 : vector<1x8x8x4xbf16> to vector<8x8x4xbf16>
    %45 = vector.shape_cast %36 : vector<8x8x4xbf16> to vector<1x8x8x4xbf16>
    tpu.vector_store %arg7[%c1_35, %c1_36, %c1_37, %c0_38], %45 {strides = array<i32>} : memref<4x9x9x4xbf16, #tpu.memory_space<vmem>>, vector<1x8x8x4xbf16>,
    %c0_39 = arith.constant 0 : index
    %c2 = arith.constant 2 : index
    %c0_40 = arith.constant 0 : index
    %c0_41 = arith.constant 0 : index
    %c0_42 = arith.constant 0 : index
    %46 = vector.load %arg1[%c0_39, %c2, %c0_40, %c0_41, %c0_42] : memref<1x4x8x8x4xbf16, #tpu.memory_space<vmem>>, vector<1x1x8x8x4xbf16>
    %47 = vector.shape_cast %46 : vector<1x1x8x8x4xbf16> to vector<8x8x4xbf16>
    %48 = arith.extf %47 : vector<8x8x4xbf16> to vector<8x8x4xf32>
    %49 = vector.shape_cast %0 : vector<1x4xf32> to vector<1x1x4xf32>
    %50 = vector.broadcast %49 : vector<1x1x4xf32> to vector<8x8x4xf32>
    %51 = arith.mulf %48, %50 : vector<8x8x4xf32>
    %52 = vector.shape_cast %1 : vector<1x4xf32> to vector<1x1x4xf32>
    %53 = vector.broadcast %52 : vector<1x1x4xf32> to vector<8x8x4xf32>
    %54 = arith.addf %51, %53 : vector<8x8x4xf32>
    %cst_43 = arith.constant 0.000000e+00 : f32
    %55 = vector.broadcast %cst_43 : f32 to vector<8x8x4xf32>
    %56 = arith.maximumf %54, %55 : vector<8x8x4xf32>
    %57 = arith.truncf %56 : vector<8x8x4xf32> to vector<8x8x4xbf16>
    %c2_44 = arith.constant 2 : index
    %c0_45 = arith.constant 0 : index
    %c0_46 = arith.constant 0 : index
    %c0_47 = arith.constant 0 : index
    %58 = vector.load %arg7[%c2_44, %c0_45, %c0_46, %c0_47] : memref<4x9x9x4xbf16, #tpu.memory_space<vmem>>, vector<1x1x9x4xbf16>
    %59 = vector.shape_cast %58 : vector<1x1x9x4xbf16> to vector<1x9x4xbf16>
    %60 = vector.shape_cast %2 : vector<1x9x4xbf16> to vector<1x1x9x4xbf16>
    tpu.vector_store %arg7[%c2_44, %c0_45, %c0_46, %c0_47], %60 {strides = array<i32>} : memref<4x9x9x4xbf16, #tpu.memory_space<vmem>>, vector<1x1x9x4xbf16>,
    %c2_48 = arith.constant 2 : index
    %c0_49 = arith.constant 0 : index
    %c0_50 = arith.constant 0 : index
    %c0_51 = arith.constant 0 : index
    %61 = vector.load %arg7[%c2_48, %c0_49, %c0_50, %c0_51] : memref<4x9x9x4xbf16, #tpu.memory_space<vmem>>, vector<1x9x1x4xbf16>
    %62 = vector.shape_cast %61 : vector<1x9x1x4xbf16> to vector<9x1x4xbf16>
    %63 = vector.shape_cast %3 : vector<9x1x4xbf16> to vector<1x9x1x4xbf16>
    tpu.vector_store %arg7[%c2_48, %c0_49, %c0_50, %c0_51], %63 {strides = array<i32>} : memref<4x9x9x4xbf16, #tpu.memory_space<vmem>>, vector<1x9x1x4xbf16>,
    %c2_52 = arith.constant 2 : index
    %c1_53 = arith.constant 1 : index
    %c1_54 = arith.constant 1 : index
    %c0_55 = arith.constant 0 : index
    %64 = vector.load %arg7[%c2_52, %c1_53, %c1_54, %c0_55] : memref<4x9x9x4xbf16, #tpu.memory_space<vmem>>, vector<1x8x8x4xbf16>
    %65 = vector.shape_cast %64 : vector<1x8x8x4xbf16> to vector<8x8x4xbf16>
    %66 = vector.shape_cast %57 : vector<8x8x4xbf16> to vector<1x8x8x4xbf16>
    tpu.vector_store %arg7[%c2_52, %c1_53, %c1_54, %c0_55], %66 {strides = array<i32>} : memref<4x9x9x4xbf16, #tpu.memory_space<vmem>>, vector<1x8x8x4xbf16>,
    %c0_56 = arith.constant 0 : index
    %c3 = arith.constant 3 : index
    %c0_57 = arith.constant 0 : index
    %c0_58 = arith.constant 0 : index
    %c0_59 = arith.constant 0 : index
    %67 = vector.load %arg1[%c0_56, %c3, %c0_57, %c0_58, %c0_59] : memref<1x4x8x8x4xbf16, #tpu.memory_space<vmem>>, vector<1x1x8x8x4xbf16>
    %68 = vector.shape_cast %67 : vector<1x1x8x8x4xbf16> to vector<8x8x4xbf16>
    %69 = arith.extf %68 : vector<8x8x4xbf16> to vector<8x8x4xf32>
    %70 = vector.shape_cast %0 : vector<1x4xf32> to vector<1x1x4xf32>
    %71 = vector.broadcast %70 : vector<1x1x4xf32> to vector<8x8x4xf32>
    %72 = arith.mulf %69, %71 : vector<8x8x4xf32>
    %73 = vector.shape_cast %1 : vector<1x4xf32> to vector<1x1x4xf32>
    %74 = vector.broadcast %73 : vector<1x1x4xf32> to vector<8x8x4xf32>
    %75 = arith.addf %72, %74 : vector<8x8x4xf32>
    %cst_60 = arith.constant 0.000000e+00 : f32
    %76 = vector.broadcast %cst_60 : f32 to vector<8x8x4xf32>
    %77 = arith.maximumf %75, %76 : vector<8x8x4xf32>
    %78 = arith.truncf %77 : vector<8x8x4xf32> to vector<8x8x4xbf16>
    %c3_61 = arith.constant 3 : index
    %c0_62 = arith.constant 0 : index
    %c0_63 = arith.constant 0 : index
    %c0_64 = arith.constant 0 : index
    %79 = vector.load %arg7[%c3_61, %c0_62, %c0_63, %c0_64] : memref<4x9x9x4xbf16, #tpu.memory_space<vmem>>, vector<1x1x9x4xbf16>
    %80 = vector.shape_cast %79 : vector<1x1x9x4xbf16> to vector<1x9x4xbf16>
    %81 = vector.shape_cast %2 : vector<1x9x4xbf16> to vector<1x1x9x4xbf16>
    tpu.vector_store %arg7[%c3_61, %c0_62, %c0_63, %c0_64], %81 {strides = array<i32>} : memref<4x9x9x4xbf16, #tpu.memory_space<vmem>>, vector<1x1x9x4xbf16>,
    %c3_65 = arith.constant 3 : index
    %c0_66 = arith.constant 0 : index
    %c0_67 = arith.constant 0 : index
    %c0_68 = arith.constant 0 : index
    %82 = vector.load %arg7[%c3_65, %c0_66, %c0_67, %c0_68] : memref<4x9x9x4xbf16, #tpu.memory_space<vmem>>, vector<1x9x1x4xbf16>
    %83 = vector.shape_cast %82 : vector<1x9x1x4xbf16> to vector<9x1x4xbf16>
    %84 = vector.shape_cast %3 : vector<9x1x4xbf16> to vector<1x9x1x4xbf16>
    tpu.vector_store %arg7[%c3_65, %c0_66, %c0_67, %c0_68], %84 {strides = array<i32>} : memref<4x9x9x4xbf16, #tpu.memory_space<vmem>>, vector<1x9x1x4xbf16>,
    %c3_69 = arith.constant 3 : index
    %c1_70 = arith.constant 1 : index
    %c1_71 = arith.constant 1 : index
    %c0_72 = arith.constant 0 : index
    %85 = vector.load %arg7[%c3_69, %c1_70, %c1_71, %c0_72] : memref<4x9x9x4xbf16, #tpu.memory_space<vmem>>, vector<1x8x8x4xbf16>
    %86 = vector.shape_cast %85 : vector<1x8x8x4xbf16> to vector<8x8x4xbf16>
    %87 = vector.shape_cast %78 : vector<8x8x4xbf16> to vector<1x8x8x4xbf16>
    tpu.vector_store %arg7[%c3_69, %c1_70, %c1_71, %c0_72], %87 {strides = array<i32>} : memref<4x9x9x4xbf16, #tpu.memory_space<vmem>>, vector<1x8x8x4xbf16>,
    %c3_73 = arith.constant 3 : index
    %c0_74 = arith.constant 0 : index
    %c0_75 = arith.constant 0 : index
    %c0_76 = arith.constant 0 : index
    %88 = vector.load %arg7[%c3_73, %c0_74, %c0_75, %c0_76] : memref<4x9x9x4xbf16, #tpu.memory_space<vmem>>, vector<1x8x8x4xbf16>
    %89 = vector.shape_cast %88 : vector<1x8x8x4xbf16> to vector<8x8x4xbf16>
    %c0_77 = arith.constant 0 : index
    %c0_78 = arith.constant 0 : index
    %c0_79 = arith.constant 0 : index
    %90 = vector.load %arg8[%c0_77, %c0_78, %c0_79] : memref<8x8x36xbf16, #tpu.memory_space<vmem>>, vector<8x8x4xbf16>
    tpu.vector_store %arg8[%c0_77, %c0_78, %c0_79], %89 {strides = array<i32>} : memref<8x8x36xbf16, #tpu.memory_space<vmem>>, vector<8x8x4xbf16>,
    %c2_80 = arith.constant 2 : index
    %c0_81 = arith.constant 0 : index
    %c1_82 = arith.constant 1 : index
    %c0_83 = arith.constant 0 : index
    %91 = vector.load %arg7[%c2_80, %c0_81, %c1_82, %c0_83] : memref<4x9x9x4xbf16, #tpu.memory_space<vmem>>, vector<1x8x8x4xbf16>
    %92 = vector.shape_cast %91 : vector<1x8x8x4xbf16> to vector<8x8x4xbf16>
    %c0_84 = arith.constant 0 : index
    %c0_85 = arith.constant 0 : index
    %c4 = arith.constant 4 : index
    %93 = vector.load %arg8[%c0_84, %c0_85, %c4] : memref<8x8x36xbf16, #tpu.memory_space<vmem>>, vector<8x8x4xbf16>
    tpu.vector_store %arg8[%c0_84, %c0_85, %c4], %92 {strides = array<i32>} : memref<8x8x36xbf16, #tpu.memory_space<vmem>>, vector<8x8x4xbf16>,
    %c3_86 = arith.constant 3 : index
    %c0_87 = arith.constant 0 : index
    %c1_88 = arith.constant 1 : index
    %c0_89 = arith.constant 0 : index
    %94 = vector.load %arg7[%c3_86, %c0_87, %c1_88, %c0_89] : memref<4x9x9x4xbf16, #tpu.memory_space<vmem>>, vector<1x8x8x4xbf16>
    %95 = vector.shape_cast %94 : vector<1x8x8x4xbf16> to vector<8x8x4xbf16>
    %c0_90 = arith.constant 0 : index
    %c0_91 = arith.constant 0 : index
    %c8 = arith.constant 8 : index
    %96 = vector.load %arg8[%c0_90, %c0_91, %c8] : memref<8x8x36xbf16, #tpu.memory_space<vmem>>, vector<8x8x4xbf16>
    tpu.vector_store %arg8[%c0_90, %c0_91, %c8], %95 {strides = array<i32>} : memref<8x8x36xbf16, #tpu.memory_space<vmem>>, vector<8x8x4xbf16>,
    %c1_92 = arith.constant 1 : index
    %c1_93 = arith.constant 1 : index
    %c0_94 = arith.constant 0 : index
    %c0_95 = arith.constant 0 : index
    %97 = vector.load %arg7[%c1_92, %c1_93, %c0_94, %c0_95] : memref<4x9x9x4xbf16, #tpu.memory_space<vmem>>, vector<1x8x8x4xbf16>
    %98 = vector.shape_cast %97 : vector<1x8x8x4xbf16> to vector<8x8x4xbf16>
    %c0_96 = arith.constant 0 : index
    %c0_97 = arith.constant 0 : index
    %c12 = arith.constant 12 : index
    %99 = vector.load %arg8[%c0_96, %c0_97, %c12] : memref<8x8x36xbf16, #tpu.memory_space<vmem>>, vector<8x8x4xbf16>
    tpu.vector_store %arg8[%c0_96, %c0_97, %c12], %98 {strides = array<i32>} : memref<8x8x36xbf16, #tpu.memory_space<vmem>>, vector<8x8x4xbf16>,
    %c0_98 = arith.constant 0 : index
    %c1_99 = arith.constant 1 : index
    %c1_100 = arith.constant 1 : index
    %c0_101 = arith.constant 0 : index
    %100 = vector.load %arg7[%c0_98, %c1_99, %c1_100, %c0_101] : memref<4x9x9x4xbf16, #tpu.memory_space<vmem>>, vector<1x8x8x4xbf16>
    %101 = vector.shape_cast %100 : vector<1x8x8x4xbf16> to vector<8x8x4xbf16>
    %c0_102 = arith.constant 0 : index
    %c0_103 = arith.constant 0 : index
    %c16 = arith.constant 16 : index
    %102 = vector.load %arg8[%c0_102, %c0_103, %c16] : memref<8x8x36xbf16, #tpu.memory_space<vmem>>, vector<8x8x4xbf16>
    tpu.vector_store %arg8[%c0_102, %c0_103, %c16], %101 {strides = array<i32>} : memref<8x8x36xbf16, #tpu.memory_space<vmem>>, vector<8x8x4xbf16>,
    %c1_104 = arith.constant 1 : index
    %c1_105 = arith.constant 1 : index
    %c1_106 = arith.constant 1 : index
    %c0_107 = arith.constant 0 : index
    %103 = vector.load %arg7[%c1_104, %c1_105, %c1_106, %c0_107] : memref<4x9x9x4xbf16, #tpu.memory_space<vmem>>, vector<1x8x8x4xbf16>
    %104 = vector.shape_cast %103 : vector<1x8x8x4xbf16> to vector<8x8x4xbf16>
    %c0_108 = arith.constant 0 : index
    %c0_109 = arith.constant 0 : index
    %c20 = arith.constant 20 : index
    %105 = vector.load %arg8[%c0_108, %c0_109, %c20] : memref<8x8x36xbf16, #tpu.memory_space<vmem>>, vector<8x8x4xbf16>
    tpu.vector_store %arg8[%c0_108, %c0_109, %c20], %104 {strides = array<i32>} : memref<8x8x36xbf16, #tpu.memory_space<vmem>>, vector<8x8x4xbf16>,
    %c3_110 = arith.constant 3 : index
    %c1_111 = arith.constant 1 : index
    %c0_112 = arith.constant 0 : index
    %c0_113 = arith.constant 0 : index
    %106 = vector.load %arg7[%c3_110, %c1_111, %c0_112, %c0_113] : memref<4x9x9x4xbf16, #tpu.memory_space<vmem>>, vector<1x8x8x4xbf16>
    %107 = vector.shape_cast %106 : vector<1x8x8x4xbf16> to vector<8x8x4xbf16>
    %c0_114 = arith.constant 0 : index
    %c0_115 = arith.constant 0 : index
    %c24 = arith.constant 24 : index
    %108 = vector.load %arg8[%c0_114, %c0_115, %c24] : memref<8x8x36xbf16, #tpu.memory_space<vmem>>, vector<8x8x4xbf16>
    tpu.vector_store %arg8[%c0_114, %c0_115, %c24], %107 {strides = array<i32>} : memref<8x8x36xbf16, #tpu.memory_space<vmem>>, vector<8x8x4xbf16>,
    %c2_116 = arith.constant 2 : index
    %c1_117 = arith.constant 1 : index
    %c1_118 = arith.constant 1 : index
    %c0_119 = arith.constant 0 : index
    %109 = vector.load %arg7[%c2_116, %c1_117, %c1_118, %c0_119] : memref<4x9x9x4xbf16, #tpu.memory_space<vmem>>, vector<1x8x8x4xbf16>
    %110 = vector.shape_cast %109 : vector<1x8x8x4xbf16> to vector<8x8x4xbf16>
    %c0_120 = arith.constant 0 : index
    %c0_121 = arith.constant 0 : index
    %c28 = arith.constant 28 : index
    %111 = vector.load %arg8[%c0_120, %c0_121, %c28] : memref<8x8x36xbf16, #tpu.memory_space<vmem>>, vector<8x8x4xbf16>
    tpu.vector_store %arg8[%c0_120, %c0_121, %c28], %110 {strides = array<i32>} : memref<8x8x36xbf16, #tpu.memory_space<vmem>>, vector<8x8x4xbf16>,
    %c3_122 = arith.constant 3 : index
    %c1_123 = arith.constant 1 : index
    %c1_124 = arith.constant 1 : index
    %c0_125 = arith.constant 0 : index
    %112 = vector.load %arg7[%c3_122, %c1_123, %c1_124, %c0_125] : memref<4x9x9x4xbf16, #tpu.memory_space<vmem>>, vector<1x8x8x4xbf16>
    %113 = vector.shape_cast %112 : vector<1x8x8x4xbf16> to vector<8x8x4xbf16>
    %c0_126 = arith.constant 0 : index
    %c0_127 = arith.constant 0 : index
    %c32 = arith.constant 32 : index
    %114 = vector.load %arg8[%c0_126, %c0_127, %c32] : memref<8x8x36xbf16, #tpu.memory_space<vmem>>, vector<8x8x4xbf16>
    tpu.vector_store %arg8[%c0_126, %c0_127, %c32], %113 {strides = array<i32>} : memref<8x8x36xbf16, #tpu.memory_space<vmem>>, vector<8x8x4xbf16>,
    %c0_128 = arith.constant 0 : index
    %c0_129 = arith.constant 0 : index
    %c0_130 = arith.constant 0 : index
    %115 = vector.load %arg8[%c0_128, %c0_129, %c0_130] : memref<8x8x36xbf16, #tpu.memory_space<vmem>>, vector<8x8x36xbf16>
    %116 = vector.shape_cast %115 : vector<8x8x36xbf16> to vector<64x36xbf16>
    %c0_131 = arith.constant 0 : index
    %c0_132 = arith.constant 0 : index
    %117 = vector.load %arg4[%c0_131, %c0_132] : memref<36x8xbf16, #tpu.memory_space<vmem>>, vector<36x8xbf16>
    %cst_133 = arith.constant dense<0.000000e+00> : vector<64x8xf32>
    %118 = tpu.matmul %116, %117, %cst_133 {dimension_numbers = #tpu.dot_dimension_numbers<[1], [0], [0], [1], [0, 0, 1, 1], [], []>} : vector<64x36xbf16>, vector<36x8xbf16>, vector<64x8xf32> -> vector<64x8xf32>
    %cst_134 = arith.constant dense<0.000000e+00> : vector<8xf32>
    %119 = vector.multi_reduction <add>, %118, %cst_134 [0] : vector<64x8xf32> to vector<8xf32>
    %120 = vector.shape_cast %119 : vector<8xf32> to vector<1x8xf32>
    %c0_135 = arith.constant 0 : index
    %c0_136 = arith.constant 0 : index
    %c0_137 = arith.constant 0 : index
    %121 = vector.load %arg6[%c0_135, %c0_136, %c0_137] : memref<1x2x8xf32, #tpu.memory_space<vmem>>, vector<1x1x8xf32>
    %122 = vector.shape_cast %121 : vector<1x1x8xf32> to vector<1x8xf32>
    %123 = vector.shape_cast %120 : vector<1x8xf32> to vector<1x1x8xf32>
    tpu.vector_store %arg6[%c0_135, %c0_136, %c0_137], %123 {strides = array<i32>} : memref<1x2x8xf32, #tpu.memory_space<vmem>>, vector<1x1x8xf32>,
    %124 = arith.mulf %118, %118 : vector<64x8xf32>
    %cst_138 = arith.constant dense<0.000000e+00> : vector<8xf32>
    %125 = vector.multi_reduction <add>, %124, %cst_138 [0] : vector<64x8xf32> to vector<8xf32>
    %126 = vector.shape_cast %125 : vector<8xf32> to vector<1x8xf32>
    %c0_139 = arith.constant 0 : index
    %c1_140 = arith.constant 1 : index
    %c0_141 = arith.constant 0 : index
    %127 = vector.load %arg6[%c0_139, %c1_140, %c0_141] : memref<1x2x8xf32, #tpu.memory_space<vmem>>, vector<1x1x8xf32>
    %128 = vector.shape_cast %127 : vector<1x1x8xf32> to vector<1x8xf32>
    %129 = vector.shape_cast %126 : vector<1x8xf32> to vector<1x1x8xf32>
    tpu.vector_store %arg6[%c0_139, %c1_140, %c0_141], %129 {strides = array<i32>} : memref<1x2x8xf32, #tpu.memory_space<vmem>>, vector<1x1x8xf32>,
    %130 = vector.shape_cast %118 : vector<64x8xf32> to vector<8x8x8xf32>
    %131 = arith.truncf %130 : vector<8x8x8xf32> to vector<8x8x8xbf16>
    %c0_142 = arith.constant 0 : index
    %c0_143 = arith.constant 0 : index
    %c0_144 = arith.constant 0 : index
    %c0_145 = arith.constant 0 : index
    %132 = vector.load %arg5[%c0_142, %c0_143, %c0_144, %c0_145] : memref<1x8x8x8xbf16, #tpu.memory_space<vmem>>, vector<1x8x8x8xbf16>
    %133 = vector.shape_cast %132 : vector<1x8x8x8xbf16> to vector<8x8x8xbf16>
    %134 = vector.shape_cast %131 : vector<8x8x8xbf16> to vector<1x8x8x8xbf16>
    tpu.vector_store %arg5[%c0_142, %c0_143, %c0_144, %c0_145], %134 {strides = array<i32>} : memref<1x8x8x8xbf16, #tpu.memory_space<vmem>>, vector<1x8x8x8xbf16>,
    return
  }
  func.func @transform_0(%arg0: i32) -> (i32, i32, i32, i32, i32) {
    %c0_i32 = arith.constant 0 : i32
    %c0_i32_0 = arith.constant 0 : i32
    %c0_i32_1 = arith.constant 0 : i32
    %c0_i32_2 = arith.constant 0 : i32
    %c0_i32_3 = arith.constant 0 : i32
    return %arg0, %c0_i32, %c0_i32_0, %c0_i32_1, %c0_i32_2 : i32, i32, i32, i32, i32
  }
  func.func @transform_1(%arg0: i32) -> (i32, i32) {
    %c0_i32 = arith.constant 0 : i32
    %c0_i32_0 = arith.constant 0 : i32
    %c0_i32_1 = arith.constant 0 : i32
    return %c0_i32, %c0_i32_0 : i32, i32
  }
  func.func @transform_2(%arg0: i32) -> (i32, i32) {
    %c0_i32 = arith.constant 0 : i32
    %c0_i32_0 = arith.constant 0 : i32
    %c0_i32_1 = arith.constant 0 : i32
    return %c0_i32, %c0_i32_0 : i32, i32
  }
  func.func @transform_3(%arg0: i32) -> (i32, i32) {
    %c0_i32 = arith.constant 0 : i32
    %c0_i32_0 = arith.constant 0 : i32
    %c0_i32_1 = arith.constant 0 : i32
    return %c0_i32, %c0_i32_0 : i32, i32
  }
  func.func @transform_4(%arg0: i32) -> (i32, i32, i32, i32) {
    %c0_i32 = arith.constant 0 : i32
    %c0_i32_0 = arith.constant 0 : i32
    %c0_i32_1 = arith.constant 0 : i32
    %c0_i32_2 = arith.constant 0 : i32
    return %arg0, %c0_i32, %c0_i32_0, %c0_i32_1 : i32, i32, i32, i32
  }
  func.func @transform_5(%arg0: i32) -> (i32, i32, i32) {
    %c0_i32 = arith.constant 0 : i32
    %c0_i32_0 = arith.constant 0 : i32
    %c0_i32_1 = arith.constant 0 : i32
    return %arg0, %c0_i32, %c0_i32_0 : i32, i32, i32
  }
}

</mosaic_0001>

<llo_original>
// kernel: tpu_custom_call.1
$region0: #{tpu_custom_call.1}
  #allocation0 [shape = 'u32[]', space=smem, size = 0x4, offset = 0x4, fixed_abs, tag = 'smem constant byte address 0x4 - core index']
  #allocation1 [shape = 'u32[144,128]{1,0:T(1,128)}', space=vmem, size = 0x12000, scoped, tag = 'internal scratch']
  #allocation2 [shape = 'bf16[4,9,9,4]{3,2,1,0:T(8,128)(2,1)}', space=vmem, size = 0x24000, scoped, tag = 'scratch operand']
  #allocation3 [shape = 'bf16[8,8,36]{2,1,0:T(8,128)(2,1)}', space=vmem, size = 0x4000, scoped, tag = 'scratch operand']
  %s0 = inlined_call_operand.vmem [shape: bf16[2,4,8,8,4], index: 0, kind: input, shape index: {}]
  %s1 = inlined_call_operand.vmem [shape: f32[1,4], index: 1, kind: input, shape index: {}]
  %s2 = inlined_call_operand.vmem [shape: f32[1,4], index: 2, kind: input, shape index: {}]
  %s3 = inlined_call_operand.vmem [shape: bf16[36,8], index: 3, kind: input, shape index: {}]
  %s4 = inlined_call_operand.hbm [shape: bf16[2,8,8,8], index: 4, kind: output, shape index: {0}]
  %s5 = inlined_call_operand.hbm [shape: f32[2,2,8], index: 5, kind: output, shape index: {1}]
  %6 = xla_tuple %s4, %s5
  %s7 = sld [smem:[#allocation0]]
  $region57: #{tpu_custom_call.1} parent=0
    _
  %s9 = ssub.s32 1, %s7
  %s10 = scalar_select 0, %s9, %s7
  $region1: #{tpu_custom_call.1} parent=0
    #allocation4 [shape = 'u8[32768]{0}', space=vmem, size = 0x8000, scoped, tag = 'output window, operand 0']
    #allocation5 [shape = 's32[2]{0}', space=sflag, size = 0x8, scoped, tag = 'scoped memory for tpu_custom_call.1']
    #allocation6 [shape = 'u8[2048]{0}', space=vmem, size = 0x800, scoped, tag = 'output window, operand 1']
    #allocation7 [shape = 's32[2]{0}', space=sflag, size = 0x8, scoped, tag = 'scoped memory for tpu_custom_call.1']
    %11 = vsyncpa [#allocation5], 0
    %s12 = scalar_lea.sflag [#allocation5], 1
    %13 = vsyncpa %s12, 0
    %14 = vsyncpa [#allocation7], 0
    %s15 = scalar_lea.sflag [#allocation7], 1
    %16 = vsyncpa %s15, 0
    loop: start=0, step=1, limit=4
    $region2: #{tpu_custom_call.1} parent=1 // loop_pre_header
      _
    $region3: #{tpu_custom_call.1} parent=1 // loop_header
      %s18 = sphi 0, %s22
      %p19 = scmp.ge.s32.totalorder %s18, 4
      %s28 = sphi 0, %s30
      %s31 = sphi 0, %s28
      %s32 = sphi 0, %s31
      %s48 = sphi 0, %s32
      %s52 = sphi 0, %s52
      %s54 = sphi 0, %s52
      %s55 = sphi 0, %s54
      %s69 = sphi 0, %s55
      %s73 = sphi 0, %s73
      %s75 = sphi 0, %s73
      %s76 = sphi 0, %s75
      %s90 = sphi 0, %s76
      %s94 = sphi 0, %s94
      %s96 = sphi 0, %s94
      %s97 = sphi 0, %s96
      %s111 = sphi 0, %s97
      %s117 = sphi 0, %s119
      %s120 = sphi 0, %s117
      %s121 = sphi 0, %s120
      %s137 = sphi 0, %s121
      %s143 = sphi 0, %s145
      %s146 = sphi 0, %s143
      %s147 = sphi 0, %s146
      %s163 = sphi 0, %s147
    $region4: #{tpu_custom_call.1} parent=1 // loop_header_branch
      %21 = sbr.rel (%p19) target = $region8
    $region5: #{tpu_custom_call.1} parent=1 // loop_body
      %s23 = ssub.s32 %s18, 1
      %s24 = ssub.s32 %s18, 2
      %s25 = sadd.s32 %s18, 1
      %s26 = ssub.s32 %s18, %s25
      %p27 = scmp.eq.s32.totalorder %s26, 0
      %s29 = sadd.s32 %s28, 1
      %s30 = scalar_select %p27, %s28, %s29
      %p33 = pneg %p27
      %p34 = scmp.eq.s32.totalorder %s18, 1
      %p35 = por %p33, %p34
      %p36 = scmp.ne.s32.totalorder %s28, %s31
      %p37 = scmp.eq.s32.totalorder %s18, 0
      %p38 = por %p36, %p37
      %p39 = scmp.ne.s32.totalorder %s28, %s31
      %p40 = scmp.eq.s32.totalorder %s23, 1
      %p41 = por %p39, %p40
      %p42 = scmp.ne.s32.totalorder %s31, %s32
      %p43 = scmp.eq.s32.totalorder %s23, 0
      %p44 = por %p42, %p43
      %p45 = scmp.ne.s32.totalorder %s31, %s32
      %p46 = scmp.eq.s32.totalorder %s24, 1
      %p47 = por %p45, %p46
      %p49 = scmp.ne.s32.totalorder %s32, %s48
      %p50 = scmp.eq.s32.totalorder %s24, 0
      %p51 = por %p49, %p50
      %s53 = sadd.s32 %s52, 1
      %p56 = scmp.eq.s32.totalorder %s18, 1
      %p57 = scmp.ne.s32.totalorder %s52, %s54
      %p58 = scmp.eq.s32.totalorder %s18, 0
      %p59 = por %p57, %p58
      %p60 = scmp.ne.s32.totalorder %s52, %s54
      %p61 = scmp.eq.s32.totalorder %s23, 1
      %p62 = por %p60, %p61
      %p63 = scmp.ne.s32.totalorder %s54, %s55
      %p64 = scmp.eq.s32.totalorder %s23, 0
      %p65 = por %p63, %p64
      %p66 = scmp.ne.s32.totalorder %s54, %s55
      %p67 = scmp.eq.s32.totalorder %s24, 1
      %p68 = por %p66, %p67
      %p70 = scmp.ne.s32.totalorder %s55, %s69
      %p71 = scmp.eq.s32.totalorder %s24, 0
      %p72 = por %p70, %p71
      %s74 = sadd.s32 %s73, 1
      %p77 = scmp.eq.s32.totalorder %s18, 1
      %p78 = scmp.ne.s32.totalorder %s73, %s75
      %p79 = scmp.eq.s32.totalorder %s18, 0
      %p80 = por %p78, %p79
      %p81 = scmp.ne.s32.totalorder %s73, %s75
      %p82 = scmp.eq.s32.totalorder %s23, 1
      %p83 = por %p81, %p82
      %p84 = scmp.ne.s32.totalorder %s75, %s76
      %p85 = scmp.eq.s32.totalorder %s23, 0
      %p86 = por %p84, %p85
      %p87 = scmp.ne.s32.totalorder %s75, %s76
      %p88 = scmp.eq.s32.totalorder %s24, 1
      %p89 = por %p87, %p88
      %p91 = scmp.ne.s32.totalorder %s76, %s90
      %p92 = scmp.eq.s32.totalorder %s24, 0
      %p93 = por %p91, %p92
      %s95 = sadd.s32 %s94, 1
      %p98 = scmp.eq.s32.totalorder %s18, 1
      %p99 = scmp.ne.s32.totalorder %s94, %s96
      %p100 = scmp.eq.s32.totalorder %s18, 0
      %p101 = por %p99, %p100
      %p102 = scmp.ne.s32.totalorder %s94, %s96
      %p103 = scmp.eq.s32.totalorder %s23, 1
      %p104 = por %p102, %p103
      %p105 = scmp.ne.s32.totalorder %s96, %s97
      %p106 = scmp.eq.s32.totalorder %s23, 0
      %p107 = por %p105, %p106
      %p108 = scmp.ne.s32.totalorder %s96, %s97
      %p109 = scmp.eq.s32.totalorder %s24, 1
      %p110 = por %p108, %p109
      %p112 = scmp.ne.s32.totalorder %s97, %s111
      %p113 = scmp.eq.s32.totalorder %s24, 0
      %p114 = por %p112, %p113
      %s115 = ssub.s32 %s18, %s25
      %p116 = scmp.eq.s32.totalorder %s115, 0
      %s118 = sadd.s32 %s117, 1
      %s119 = scalar_select %p116, %s117, %s118
      %p122 = pneg %p116
      %p123 = scmp.eq.s32.totalorder %s18, 1
      %p124 = por %p122, %p123
      %p125 = scmp.ne.s32.totalorder %s117, %s120
      %p126 = scmp.eq.s32.totalorder %s18, 0
      %p127 = por %p125, %p126
      %p128 = scmp.ne.s32.totalorder %s117, %s120
      %p129 = scmp.eq.s32.totalorder %s23, 1
      %p130 = por %p128, %p129
      %p131 = scmp.ne.s32.totalorder %s120, %s121
      %p132 = scmp.eq.s32.totalorder %s23, 0
      %p133 = por %p131, %p132
      %p134 = scmp.ne.s32.totalorder %s120, %s121
      %p135 = scmp.eq.s32.totalorder %s24, 1
      %p136 = por %p134, %p135
      %p138 = scmp.ne.s32.totalorder %s121, %s137
      %p139 = scmp.eq.s32.totalorder %s24, 0
      %p140 = por %p138, %p139
      %s141 = ssub.s32 %s18, %s25
      %p142 = scmp.eq.s32.totalorder %s141, 0
      %s144 = sadd.s32 %s143, 1
      %s145 = scalar_select %p142, %s143, %s144
      %p148 = pneg %p142
      %p149 = scmp.eq.s32.totalorder %s18, 1
      %p150 = por %p148, %p149
      %p151 = scmp.ne.s32.totalorder %s143, %s146
      %p152 = scmp.eq.s32.totalorder %s18, 0
      %p153 = por %p151, %p152
      %p154 = scmp.ne.s32.totalorder %s143, %s146
      %p155 = scmp.eq.s32.totalorder %s23, 1
      %p156 = por %p154, %p155
      %p157 = scmp.ne.s32.totalorder %s146, %s147
      %p158 = scmp.eq.s32.totalorder %s23, 0
      %p159 = por %p157, %p158
      %p160 = scmp.ne.s32.totalorder %s146, %s147
      %p161 = scmp.eq.s32.totalorder %s24, 1
      %p162 = por %p160, %p161
      %p164 = scmp.ne.s32.totalorder %s147, %s163
      %p165 = scmp.eq.s32.totalorder %s24, 0
      %p166 = por %p164, %p165
      %p167 = scmp.le.s32.totalorder 1, %s18
      %p168 = scmp.lt.s32.totalorder %s18, 3
      %p169 = pnand %p167, %p168
      %p170 = pneg %p169
      // Predicated region
      $region9: #{tpu_custom_call.1} parent=5 // pred_check
        _
      $region10: #{tpu_custom_call.1} parent=5 // pred_check_branch
        %172 = sbr.rel (%p169) target = $region12
      $region11: #{tpu_custom_call.1} parent=5 // pred_region
        %s173 = ssub.s32 %s18, 1
        // Predicated region
        $region13: #{tpu_custom_call.1} parent=11 // pred_check
          %p174 = pneg %p65
        $region14: #{tpu_custom_call.1} parent=11 // pred_check_branch
          %176 = sbr.rel (%p174) target = $region16
        $region15: #{tpu_custom_call.1} parent=11 // pred_region
          _
        $region16: #{tpu_custom_call.1} parent=11 // pred_fallthru
          _
        // Predicated region
        $region17: #{tpu_custom_call.1} parent=11 // pred_check
          %p177 = pneg %p86
        $region18: #{tpu_custom_call.1} parent=11 // pred_check_branch
          %179 = sbr.rel (%p177) target = $region20
        $region19: #{tpu_custom_call.1} parent=11 // pred_region
          _
        $region20: #{tpu_custom_call.1} parent=11 // pred_fallthru
          _
        // Predicated region
        $region21: #{tpu_custom_call.1} parent=11 // pred_check
          %p180 = pneg %p107
        $region22: #{tpu_custom_call.1} parent=11 // pred_check_branch
          %182 = sbr.rel (%p180) target = $region24
        $region23: #{tpu_custom_call.1} parent=11 // pred_region
          _
        $region24: #{tpu_custom_call.1} parent=11 // pred_fallthru
          _
      $region12: #{tpu_custom_call.1} parent=5 // pred_fallthru
        _
      %p183 = scmp.lt.s32.totalorder %s18, 2
      // Predicated region
      $region25: #{tpu_custom_call.1} parent=5 // pred_check
        %p184 = pneg %p183
      $region26: #{tpu_custom_call.1} parent=5 // pred_check_branch
        %186 = sbr.rel (%p184) target = $region28
      $region27: #{tpu_custom_call.1} parent=5 // pred_region
        // Predicated region
        $region29: #{tpu_custom_call.1} parent=27 // pred_check
          %p187 = pneg %p38
        $region30: #{tpu_custom_call.1} parent=27 // pred_check_branch
          %189 = sbr.rel (%p187) target = $region32
        $region31: #{tpu_custom_call.1} parent=27 // pred_region
          %p190 = scmp.lt.s32.totalorder %s18, 1
          %s191 = scalar_select %p190, %s18, 1
          %s192 = smul.addr %s191, 32
          %s193 = smul.addr %s192, 4
          %s194 = scalar_lea.vmem %s0, %s193
        $region32: #{tpu_custom_call.1} parent=27 // pred_fallthru
          _
      $region28: #{tpu_custom_call.1} parent=5 // pred_fallthru
        _
      %p195 = scmp.le.s32.totalorder 1, %s18
      %p196 = scmp.lt.s32.totalorder %s18, 3
      %p197 = pnand %p195, %p196
      %p198 = pneg %p197
      // Predicated region
      $region33: #{tpu_custom_call.1} parent=5 // pred_check
        _
      $region34: #{tpu_custom_call.1} parent=5 // pred_check_branch
        %200 = sbr.rel (%p197) target = $region36
      $region35: #{tpu_custom_call.1} parent=5 // pred_region
        %s201 = ssub.s32 %s18, 1
        %p202 = scmp.lt.s32.totalorder %s23, 1
        %s203 = scalar_select %p202, %s23, 1
        %s204 = smul.addr %s203, 32
        %s205 = smul.addr %s204, 4
        %s206 = scalar_lea.vmem %s0, %s205
        %p207 = pneg %p44
        %p208 = pneg %p41
        %p209 = pneg %p65
        %p210 = pneg %p62
        %p211 = pneg %p86
        %p212 = pneg %p83
        %p213 = pneg %p107
        %p214 = pneg %p104
        %p215 = pneg %p133
        %p216 = pneg %p130
        %s217 = sand.u32 %s120, 1
        %s218 = scalar_lea.sflag [#allocation5], %s217
        %s219 = sand.u32 %s120, 1
        %s220 = smul.addr %s219, 32
        %s221 = scalar_lea.vmem [#allocation4], %s220
        %p222 = pneg %p159
        %p223 = pneg %p156
        %s224 = sand.u32 %s146, 1
        %s225 = scalar_lea.sflag [#allocation7], %s224
        %s226 = sand.u32 %s146, 1
        %s227 = smul.addr %s226, 2
        %s228 = scalar_lea.vmem [#allocation6], %s227
        %p229 = scmp.lt.s32.totalorder %s23, 1
        %s230 = scalar_select %p229, %s23, 1
        %s231 = smul.addr %s230, 32
        %s232 = smul.addr %s231, 4
        %s233 = scalar_lea.vmem %s0, %s232
        %v235 = vld [vmem:[%s1] sm:$0x1]
        %v236 = vld [vmem:[%s2] sm:$0x1]
        %v237 = vld [vmem:[%s233] sm:$0xf]
        %v238 = vld [vmem:[%s233 + $0x4] sm:$0xf]
        %v239 = vld [vmem:[%s233 + $0x8] sm:$0xf]
        %v240 = vld [vmem:[%s233 + $0xc] sm:$0xf]
        %v241 = vld [vmem:[%s233 + $0x10] sm:$0xf]
        %v242 = vld [vmem:[%s233 + $0x14] sm:$0xf]
        %v243 = vld [vmem:[%s233 + $0x18] sm:$0xf]
        %v244 = vld [vmem:[%s233 + $0x1c] sm:$0xf]
        %v245 = vunpack.c.l.bf16 %v237
        %v246 = vunpack.c.l.bf16 %v238
        %v247 = vunpack.c.l.bf16 %v239
        %v248 = vunpack.c.l.bf16 %v240
        %v249 = vunpack.c.l.bf16 %v241
        %v250 = vunpack.c.l.bf16 %v242
        %v251 = vunpack.c.l.bf16 %v243
        %v252 = vunpack.c.l.bf16 %v244
        %v254 = vlaneseq
        %v255 = vshrl.u32 %v254, 7
        %v256 = vsub.s32 0, %v255
        %v257 = vrot.slane %v235, %v256
        %v259 = vmul.f32 %v245, %v257
        %v260 = vmul.f32 %v246, %v257
        %v261 = vmul.f32 %v247, %v257
        %v262 = vmul.f32 %v248, %v257
        %v263 = vmul.f32 %v249, %v257
        %v264 = vmul.f32 %v250, %v257
        %v265 = vmul.f32 %v251, %v257
        %v266 = vmul.f32 %v252, %v257
        %v268 = vlaneseq
        %v269 = vshrl.u32 %v268, 7
        %v270 = vsub.s32 0, %v269
        %v271 = vrot.slane %v236, %v270
        %v273 = vadd.f32 %v259, %v271
        %v274 = vadd.f32 %v260, %v271
        %v275 = vadd.f32 %v261, %v271
        %v276 = vadd.f32 %v262, %v271
        %v277 = vadd.f32 %v263, %v271
        %v278 = vadd.f32 %v264, %v271
        %v279 = vadd.f32 %v265, %v271
        %v280 = vadd.f32 %v266, %v271
        %v281 = vmax.f32 %v273, 0.0
        %v282 = vmax.f32 %v274, 0.0
        %v283 = vmax.f32 %v275, 0.0
        %v284 = vmax.f32 %v276, 0.0
        %v285 = vmax.f32 %v277, 0.0
        %v286 = vmax.f32 %v278, 0.0
        %v287 = vmax.f32 %v279, 0.0
        %v288 = vmax.f32 %v280, 0.0
        %v289 = vpack.c.bf16 %v281, %v281
        %v290 = vpack.c.bf16 %v282, %v282
        %v291 = vpack.c.bf16 %v283, %v283
        %v292 = vpack.c.bf16 %v284, %v284
        %v293 = vpack.c.bf16 %v285, %v285
        %v294 = vpack.c.bf16 %v286, %v286
        %v295 = vpack.c.bf16 %v287, %v287
        %v296 = vpack.c.bf16 %v288, %v288
        %vm297 = vcmask 27648
        %298 = vst.msk [vmem:[#allocation2] sm:$0xf] %vm297, 0
        %vm299 = vcmask 24576
        %vm300 = vsmask.f32 256
        %vm301 = vmand %vm299, %vm300
        %v302 = vld [vmem:[#allocation2 + $0x4] sm:$0x1]
        %v303 = vsel %vm301, 0, %v302
        %304 = vst [vmem:[#allocation2 + $0x4] sm:$0x1] %v303
        %v305 = vld [vmem:[#allocation2] sm:$0x1]
        %v306 = vsel %vm301, 0, %v305
        %307 = vst [vmem:[#allocation2] sm:$0x1] %v306
        %v308 = vld [vmem:[#allocation2 + $0x8] sm:$0x1]
        %v309 = vsel %vm301, 0, %v308
        %310 = vst [vmem:[#allocation2 + $0x8] sm:$0x1] %v309
        %v311 = vld [vmem:[#allocation2 + $0x10] sm:$0x1]
        %v312 = vsel %vm301, 0, %v311
        %313 = vst [vmem:[#allocation2 + $0x10] sm:$0x1] %v312
        %v314 = vld [vmem:[#allocation2 + $0x18] sm:$0x1]
        %v315 = vsel %vm301, 0, %v314
        %316 = vst [vmem:[#allocation2 + $0x18] sm:$0x1] %v315
        %v317 = vld [vmem:[#allocation2 + $0x20] sm:$0x1]
        %v318 = vsel %vm301, 0, %v317
        %319 = vst [vmem:[#allocation2 + $0x20] sm:$0x1] %v318
        %v320 = vld [vmem:[#allocation2 + $0x28] sm:$0x1]
        %v321 = vsel %vm301, 0, %v320
        %322 = vst [vmem:[#allocation2 + $0x28] sm:$0x1] %v321
        %v323 = vld [vmem:[#allocation2 + $0x30] sm:$0x1]
        %v324 = vsel %vm301, 0, %v323
        %325 = vst [vmem:[#allocation2 + $0x30] sm:$0x1] %v324
        %v326 = vld [vmem:[#allocation2 + $0x38] sm:$0x1]
        %v327 = vsel %vm301, 0, %v326
        %328 = vst [vmem:[#allocation2 + $0x38] sm:$0x1] %v327
        %v329 = vld [vmem:[#allocation2 + $0x40] sm:$0x1]
        %v330 = vsel %vm301, 0, %v329
        %331 = vst [vmem:[#allocation2 + $0x40] sm:$0x1] %v330
        %v340 = vunpack.c.l.b16 %v289
        %v341 = vunpack.c.l.b16 %v290
        %v342 = vunpack.c.l.b16 %v291
        %v343 = vunpack.c.l.b16 %v292
        %v344 = vunpack.c.l.b16 %v293
        %v345 = vunpack.c.l.b16 %v294
        %v346 = vunpack.c.l.b16 %v295
        %v347 = vunpack.c.l.b16 %v296
        %v348 = vpack.c.b16 %v340, %v340
        %v349 = vpack.c.b16 %v341, %v341
        %v350 = vpack.c.b16 %v342, %v342
        %v351 = vpack.c.b16 %v343, %v343
        %v352 = vpack.c.b16 %v344, %v344
        %v353 = vpack.c.b16 %v345, %v345
        %v354 = vpack.c.b16 %v346, %v346
        %v355 = vpack.c.b16 %v347, %v347
        %v357 = vshrl.u32 %v348, 16
        %v359 = vrot.slane %v357, 7
        %v360 = vshll.u32 %v348, 16
        %v362 = vor.u32 %v359, %v360
        %v363 = vrot.slane %v359, 4
        %v365 = vshrl.u32 %v349, 16
        %v367 = vrot.slane %v365, 7
        %v368 = vshll.u32 %v349, 16
        %v370 = vor.u32 %v367, %v368
        %v371 = vrot.slane %v367, 4
        %v373 = vshrl.u32 %v350, 16
        %v375 = vrot.slane %v373, 7
        %v376 = vshll.u32 %v350, 16
        %v378 = vor.u32 %v375, %v376
        %v379 = vrot.slane %v375, 4
        %v381 = vshrl.u32 %v351, 16
        %v383 = vrot.slane %v381, 7
        %v384 = vshll.u32 %v351, 16
        %v386 = vor.u32 %v383, %v384
        %v387 = vrot.slane %v383, 4
        %v389 = vshrl.u32 %v352, 16
        %v391 = vrot.slane %v389, 7
        %v392 = vshll.u32 %v352, 16
        %v394 = vor.u32 %v391, %v392
        %v395 = vrot.slane %v391, 4
        %v397 = vshrl.u32 %v353, 16
        %v399 = vrot.slane %v397, 7
        %v400 = vshll.u32 %v353, 16
        %v402 = vor.u32 %v399, %v400
        %v403 = vrot.slane %v399, 4
        %v405 = vshrl.u32 %v354, 16
        %v407 = vrot.slane %v405, 7
        %v408 = vshll.u32 %v354, 16
        %v410 = vor.u32 %v407, %v408
        %v411 = vrot.slane %v407, 4
        %v413 = vshrl.u32 %v355, 16
        %v415 = vrot.slane %v413, 7
        %v416 = vshll.u32 %v355, 16
        %v418 = vor.u32 %v415, %v416
        %v419 = vrot.slane %v415, 4
        %s436 = scalar_lea.vmem [#allocation2], 8
        %vm437 = vcmask 27648
        %vm438 = vsmask.f32 7938
        %vm439 = vmand %vm437, %vm438
        %v440 = vld [vmem:[%s436] sm:$0xf]
        %v441 = vsel %vm439, %v362, %v440
        %442 = vst [vmem:[%s436] sm:$0xf] %v441
        %v443 = vld [vmem:[%s436 + $0x4] sm:$0x1]
        %v444 = vsel %vm301, %v363, %v443
        %445 = vst [vmem:[%s436 + $0x4] sm:$0x1] %v444
        %v446 = vld [vmem:[%s436 + $0x8] sm:$0xf]
        %v447 = vsel %vm439, %v370, %v446
        %448 = vst [vmem:[%s436 + $0x8] sm:$0xf] %v447
        %v449 = vld [vmem:[%s436 + $0xc] sm:$0x1]
        %v450 = vsel %vm301, %v371, %v449
        %451 = vst [vmem:[%s436 + $0xc] sm:$0x1] %v450
        %v452 = vld [vmem:[%s436 + $0x10] sm:$0xf]
        %v453 = vsel %vm439, %v378, %v452
        %454 = vst [vmem:[%s436 + $0x10] sm:$0xf] %v453
        %v455 = vld [vmem:[%s436 + $0x14] sm:$0x1]
        %v456 = vsel %vm301, %v379, %v455
        %457 = vst [vmem:[%s436 + $0x14] sm:$0x1] %v456
        %v458 = vld [vmem:[%s436 + $0x18] sm:$0xf]
        %v459 = vsel %vm439, %v386, %v458
        %460 = vst [vmem:[%s436 + $0x18] sm:$0xf] %v459
        %v461 = vld [vmem:[%s436 + $0x1c] sm:$0x1]
        %v462 = vsel %vm301, %v387, %v461
        %463 = vst [vmem:[%s436 + $0x1c] sm:$0x1] %v462
        %v464 = vld [vmem:[%s436 + $0x20] sm:$0xf]
        %v465 = vsel %vm439, %v394, %v464
        %466 = vst [vmem:[%s436 + $0x20] sm:$0xf] %v465
        %v467 = vld [vmem:[%s436 + $0x24] sm:$0x1]
        %v468 = vsel %vm301, %v395, %v467
        %469 = vst [vmem:[%s436 + $0x24] sm:$0x1] %v468
        %v470 = vld [vmem:[%s436 + $0x28] sm:$0xf]
        %v471 = vsel %vm439, %v402, %v470
        %472 = vst [vmem:[%s436 + $0x28] sm:$0xf] %v471
        %v473 = vld [vmem:[%s436 + $0x2c] sm:$0x1]
        %v474 = vsel %vm301, %v403, %v473
        %475 = vst [vmem:[%s436 + $0x2c] sm:$0x1] %v474
        %v476 = vld [vmem:[%s436 + $0x30] sm:$0xf]
        %v477 = vsel %vm439, %v410, %v476
        %478 = vst [vmem:[%s436 + $0x30] sm:$0xf] %v477
        %v479 = vld [vmem:[%s436 + $0x34] sm:$0x1]
        %v480 = vsel %vm301, %v411, %v479
        %481 = vst [vmem:[%s436 + $0x34] sm:$0x1] %v480
        %v482 = vld [vmem:[%s436 + $0x38] sm:$0xf]
        %v483 = vsel %vm439, %v418, %v482
        %484 = vst [vmem:[%s436 + $0x38] sm:$0xf] %v483
        %v485 = vld [vmem:[%s436 + $0x3c] sm:$0x1]
        %v486 = vsel %vm301, %v419, %v485
        %487 = vst [vmem:[%s436 + $0x3c] sm:$0x1] %v486
        %s488 = scalar_lea.vmem %s233, 32
        %v489 = vld [vmem:[%s488] sm:$0xf]
        %v490 = vld [vmem:[%s488 + $0x4] sm:$0xf]
        %v491 = vld [vmem:[%s488 + $0x8] sm:$0xf]
        %v492 = vld [vmem:[%s488 + $0xc] sm:$0xf]
        %v493 = vld [vmem:[%s488 + $0x10] sm:$0xf]
        %v494 = vld [vmem:[%s488 + $0x14] sm:$0xf]
        %v495 = vld [vmem:[%s488 + $0x18] sm:$0xf]
        %v496 = vld [vmem:[%s488 + $0x1c] sm:$0xf]
        %v497 = vunpack.c.l.bf16 %v489
        %v498 = vunpack.c.l.bf16 %v490
        %v499 = vunpack.c.l.bf16 %v491
        %v500 = vunpack.c.l.bf16 %v492
        %v501 = vunpack.c.l.bf16 %v493
        %v502 = vunpack.c.l.bf16 %v494
        %v503 = vunpack.c.l.bf16 %v495
        %v504 = vunpack.c.l.bf16 %v496
        %v505 = vmul.f32 %v497, %v257
        %v506 = vmul.f32 %v498, %v257
        %v507 = vmul.f32 %v499, %v257
        %v508 = vmul.f32 %v500, %v257
        %v509 = vmul.f32 %v501, %v257
        %v510 = vmul.f32 %v502, %v257
        %v511 = vmul.f32 %v503, %v257
        %v512 = vmul.f32 %v504, %v257
        %v513 = vadd.f32 %v505, %v271
        %v514 = vadd.f32 %v506, %v271
        %v515 = vadd.f32 %v507, %v271
        %v516 = vadd.f32 %v508, %v271
        %v517 = vadd.f32 %v509, %v271
        %v518 = vadd.f32 %v510, %v271
        %v519 = vadd.f32 %v511, %v271
        %v520 = vadd.f32 %v512, %v271
        %v521 = vmax.f32 %v513, 0.0
        %v522 = vmax.f32 %v514, 0.0
        %v523 = vmax.f32 %v515, 0.0
        %v524 = vmax.f32 %v516, 0.0
        %v525 = vmax.f32 %v517, 0.0
        %v526 = vmax.f32 %v518, 0.0
        %v527 = vmax.f32 %v519, 0.0
        %v528 = vmax.f32 %v520, 0.0
        %v529 = vpack.c.bf16 %v521, %v521
        %v530 = vpack.c.bf16 %v522, %v522
        %v531 = vpack.c.bf16 %v523, %v523
        %v532 = vpack.c.bf16 %v524, %v524
        %v533 = vpack.c.bf16 %v525, %v525
        %v534 = vpack.c.bf16 %v526, %v526
        %v535 = vpack.c.bf16 %v527, %v527
        %v536 = vpack.c.bf16 %v528, %v528
        %s537 = scalar_lea.vmem [#allocation2], 72
        %538 = vst.msk [vmem:[%s537] sm:$0xf] %vm297, 0
        %v539 = vld [vmem:[%s537 + $0x4] sm:$0x1]
        %v540 = vsel %vm301, 0, %v539
        %541 = vst [vmem:[%s537 + $0x4] sm:$0x1] %v540
        %v542 = vld [vmem:[%s537] sm:$0x1]
        %v543 = vsel %vm301, 0, %v542
        %544 = vst [vmem:[%s537] sm:$0x1] %v543
        %v545 = vld [vmem:[%s537 + $0x8] sm:$0x1]
        %v546 = vsel %vm301, 0, %v545
        %547 = vst [vmem:[%s537 + $0x8] sm:$0x1] %v546
        %v548 = vld [vmem:[%s537 + $0x10] sm:$0x1]
        %v549 = vsel %vm301, 0, %v548
        %550 = vst [vmem:[%s537 + $0x10] sm:$0x1] %v549
        %v551 = vld [vmem:[%s537 + $0x18] sm:$0x1]
        %v552 = vsel %vm301, 0, %v551
        %553 = vst [vmem:[%s537 + $0x18] sm:$0x1] %v552
        %v554 = vld [vmem:[%s537 + $0x20] sm:$0x1]
        %v555 = vsel %vm301, 0, %v554
        %556 = vst [vmem:[%s537 + $0x20] sm:$0x1] %v555
        %v557 = vld [vmem:[%s537 + $0x28] sm:$0x1]
        %v558 = vsel %vm301, 0, %v557
        %559 = vst [vmem:[%s537 + $0x28] sm:$0x1] %v558
        %v560 = vld [vmem:[%s537 + $0x30] sm:$0x1]
        %v561 = vsel %vm301, 0, %v560
        %562 = vst [vmem:[%s537 + $0x30] sm:$0x1] %v561
        %v563 = vld [vmem:[%s537 + $0x38] sm:$0x1]
        %v564 = vsel %vm301, 0, %v563
        %565 = vst [vmem:[%s537 + $0x38] sm:$0x1] %v564
        %v566 = vld [vmem:[%s537 + $0x40] sm:$0x1]
        %v567 = vsel %vm301, 0, %v566
        %568 = vst [vmem:[%s537 + $0x40] sm:$0x1] %v567
        %v577 = vunpack.c.l.b16 %v529
        %v578 = vunpack.c.l.b16 %v530
        %v579 = vunpack.c.l.b16 %v531
        %v580 = vunpack.c.l.b16 %v532
        %v581 = vunpack.c.l.b16 %v533
        %v582 = vunpack.c.l.b16 %v534
        %v583 = vunpack.c.l.b16 %v535
        %v584 = vunpack.c.l.b16 %v536
        %v585 = vpack.c.b16 %v577, %v577
        %v586 = vpack.c.b16 %v578, %v578
        %v587 = vpack.c.b16 %v579, %v579
        %v588 = vpack.c.b16 %v580, %v580
        %v589 = vpack.c.b16 %v581, %v581
        %v590 = vpack.c.b16 %v582, %v582
        %v591 = vpack.c.b16 %v583, %v583
        %v592 = vpack.c.b16 %v584, %v584
        %v594 = vshrl.u32 %v585, 16
        %v596 = vrot.slane %v594, 7
        %v597 = vshll.u32 %v585, 16
        %v599 = vor.u32 %v596, %v597
        %v600 = vrot.slane %v596, 4
        %v602 = vshrl.u32 %v586, 16
        %v604 = vrot.slane %v602, 7
        %v605 = vshll.u32 %v586, 16
        %v607 = vor.u32 %v604, %v605
        %v608 = vrot.slane %v604, 4
        %v610 = vshrl.u32 %v587, 16
        %v612 = vrot.slane %v610, 7
        %v613 = vshll.u32 %v587, 16
        %v615 = vor.u32 %v612, %v613
        %v616 = vrot.slane %v612, 4
        %v618 = vshrl.u32 %v588, 16
        %v620 = vrot.slane %v618, 7
        %v621 = vshll.u32 %v588, 16
        %v623 = vor.u32 %v620, %v621
        %v624 = vrot.slane %v620, 4
        %v626 = vshrl.u32 %v589, 16
        %v628 = vrot.slane %v626, 7
        %v629 = vshll.u32 %v589, 16
        %v631 = vor.u32 %v628, %v629
        %v632 = vrot.slane %v628, 4
        %v634 = vshrl.u32 %v590, 16
        %v636 = vrot.slane %v634, 7
        %v637 = vshll.u32 %v590, 16
        %v639 = vor.u32 %v636, %v637
        %v640 = vrot.slane %v636, 4
        %v642 = vshrl.u32 %v591, 16
        %v644 = vrot.slane %v642, 7
        %v645 = vshll.u32 %v591, 16
        %v647 = vor.u32 %v644, %v645
        %v648 = vrot.slane %v644, 4
        %v650 = vshrl.u32 %v592, 16
        %v652 = vrot.slane %v650, 7
        %v653 = vshll.u32 %v592, 16
        %v655 = vor.u32 %v652, %v653
        %v656 = vrot.slane %v652, 4
        %s673 = scalar_lea.vmem [#allocation2], 80
        %v674 = vld [vmem:[%s673] sm:$0xf]
        %v675 = vsel %vm439, %v599, %v674
        %676 = vst [vmem:[%s673] sm:$0xf] %v675
        %v677 = vld [vmem:[%s673 + $0x4] sm:$0x1]
        %v678 = vsel %vm301, %v600, %v677
        %679 = vst [vmem:[%s673 + $0x4] sm:$0x1] %v678
        %v680 = vld [vmem:[%s673 + $0x8] sm:$0xf]
        %v681 = vsel %vm439, %v607, %v680
        %682 = vst [vmem:[%s673 + $0x8] sm:$0xf] %v681
        %v683 = vld [vmem:[%s673 + $0xc] sm:$0x1]
        %v684 = vsel %vm301, %v608, %v683
        %685 = vst [vmem:[%s673 + $0xc] sm:$0x1] %v684
        %v686 = vld [vmem:[%s673 + $0x10] sm:$0xf]
        %v687 = vsel %vm439, %v615, %v686
        %688 = vst [vmem:[%s673 + $0x10] sm:$0xf] %v687
        %v689 = vld [vmem:[%s673 + $0x14] sm:$0x1]
        %v690 = vsel %vm301, %v616, %v689
        %691 = vst [vmem:[%s673 + $0x14] sm:$0x1] %v690
        %v692 = vld [vmem:[%s673 + $0x18] sm:$0xf]
        %v693 = vsel %vm439, %v623, %v692
        %694 = vst [vmem:[%s673 + $0x18] sm:$0xf] %v693
        %v695 = vld [vmem:[%s673 + $0x1c] sm:$0x1]
        %v696 = vsel %vm301, %v624, %v695
        %697 = vst [vmem:[%s673 + $0x1c] sm:$0x1] %v696
        %v698 = vld [vmem:[%s673 + $0x20] sm:$0xf]
        %v699 = vsel %vm439, %v631, %v698
        %700 = vst [vmem:[%s673 + $0x20] sm:$0xf] %v699
        %v701 = vld [vmem:[%s673 + $0x24] sm:$0x1]
        %v702 = vsel %vm301, %v632, %v701
        %703 = vst [vmem:[%s673 + $0x24] sm:$0x1] %v702
        %v704 = vld [vmem:[%s673 + $0x28] sm:$0xf]
        %v705 = vsel %vm439, %v639, %v704
        %706 = vst [vmem:[%s673 + $0x28] sm:$0xf] %v705
        %v707 = vld [vmem:[%s673 + $0x2c] sm:$0x1]
        %v708 = vsel %vm301, %v640, %v707
        %709 = vst [vmem:[%s673 + $0x2c] sm:$0x1] %v708
        %v710 = vld [vmem:[%s673 + $0x30] sm:$0xf]
        %v711 = vsel %vm439, %v647, %v710
        %712 = vst [vmem:[%s673 + $0x30] sm:$0xf] %v711
        %v713 = vld [vmem:[%s673 + $0x34] sm:$0x1]
        %v714 = vsel %vm301, %v648, %v713
        %715 = vst [vmem:[%s673 + $0x34] sm:$0x1] %v714
        %v716 = vld [vmem:[%s673 + $0x38] sm:$0xf]
        %v717 = vsel %vm439, %v655, %v716
        %718 = vst [vmem:[%s673 + $0x38] sm:$0xf] %v717
        %v719 = vld [vmem:[%s673 + $0x3c] sm:$0x1]
        %v720 = vsel %vm301, %v656, %v719
        %721 = vst [vmem:[%s673 + $0x3c] sm:$0x1] %v720
        %s722 = scalar_lea.vmem %s233, 64
        %v723 = vld [vmem:[%s722] sm:$0xf]
        %v724 = vld [vmem:[%s722 + $0x4] sm:$0xf]
        %v725 = vld [vmem:[%s722 + $0x8] sm:$0xf]
        %v726 = vld [vmem:[%s722 + $0xc] sm:$0xf]
        %v727 = vld [vmem:[%s722 + $0x10] sm:$0xf]
        %v728 = vld [vmem:[%s722 + $0x14] sm:$0xf]
        %v729 = vld [vmem:[%s722 + $0x18] sm:$0xf]
        %v730 = vld [vmem:[%s722 + $0x1c] sm:$0xf]
        %v731 = vunpack.c.l.bf16 %v723
        %v732 = vunpack.c.l.bf16 %v724
        %v733 = vunpack.c.l.bf16 %v725
        %v734 = vunpack.c.l.bf16 %v726
        %v735 = vunpack.c.l.bf16 %v727
        %v736 = vunpack.c.l.bf16 %v728
        %v737 = vunpack.c.l.bf16 %v729
        %v738 = vunpack.c.l.bf16 %v730
        %v739 = vmul.f32 %v731, %v257
        %v740 = vmul.f32 %v732, %v257
        %v741 = vmul.f32 %v733, %v257
        %v742 = vmul.f32 %v734, %v257
        %v743 = vmul.f32 %v735, %v257
        %v744 = vmul.f32 %v736, %v257
        %v745 = vmul.f32 %v737, %v257
        %v746 = vmul.f32 %v738, %v257
        %v747 = vadd.f32 %v739, %v271
        %v748 = vadd.f32 %v740, %v271
        %v749 = vadd.f32 %v741, %v271
        %v750 = vadd.f32 %v742, %v271
        %v751 = vadd.f32 %v743, %v271
        %v752 = vadd.f32 %v744, %v271
        %v753 = vadd.f32 %v745, %v271
        %v754 = vadd.f32 %v746, %v271
        %v755 = vmax.f32 %v747, 0.0
        %v756 = vmax.f32 %v748, 0.0
        %v757 = vmax.f32 %v749, 0.0
        %v758 = vmax.f32 %v750, 0.0
        %v759 = vmax.f32 %v751, 0.0
        %v760 = vmax.f32 %v752, 0.0
        %v761 = vmax.f32 %v753, 0.0
        %v762 = vmax.f32 %v754, 0.0
        %v763 = vpack.c.bf16 %v755, %v755
        %v764 = vpack.c.bf16 %v756, %v756
        %v765 = vpack.c.bf16 %v757, %v757
        %v766 = vpack.c.bf16 %v758, %v758
        %v767 = vpack.c.bf16 %v759, %v759
        %v768 = vpack.c.bf16 %v760, %v760
        %v769 = vpack.c.bf16 %v761, %v761
        %v770 = vpack.c.bf16 %v762, %v762
        %s771 = scalar_lea.vmem [#allocation2], 144
        %772 = vst.msk [vmem:[%s771] sm:$0xf] %vm297, 0
        %v773 = vld [vmem:[%s771 + $0x4] sm:$0x1]
        %v774 = vsel %vm301, 0, %v773
        %775 = vst [vmem:[%s771 + $0x4] sm:$0x1] %v774
        %v776 = vld [vmem:[%s771] sm:$0x1]
        %v777 = vsel %vm301, 0, %v776
        %778 = vst [vmem:[%s771] sm:$0x1] %v777
        %v779 = vld [vmem:[%s771 + $0x8] sm:$0x1]
        %v780 = vsel %vm301, 0, %v779
        %781 = vst [vmem:[%s771 + $0x8] sm:$0x1] %v780
        %v782 = vld [vmem:[%s771 + $0x10] sm:$0x1]
        %v783 = vsel %vm301, 0, %v782
        %784 = vst [vmem:[%s771 + $0x10] sm:$0x1] %v783
        %v785 = vld [vmem:[%s771 + $0x18] sm:$0x1]
        %v786 = vsel %vm301, 0, %v785
        %787 = vst [vmem:[%s771 + $0x18] sm:$0x1] %v786
        %v788 = vld [vmem:[%s771 + $0x20] sm:$0x1]
        %v789 = vsel %vm301, 0, %v788
        %790 = vst [vmem:[%s771 + $0x20] sm:$0x1] %v789
        %v791 = vld [vmem:[%s771 + $0x28] sm:$0x1]
        %v792 = vsel %vm301, 0, %v791
        %793 = vst [vmem:[%s771 + $0x28] sm:$0x1] %v792
        %v794 = vld [vmem:[%s771 + $0x30] sm:$0x1]
        %v795 = vsel %vm301, 0, %v794
        %796 = vst [vmem:[%s771 + $0x30] sm:$0x1] %v795
        %v797 = vld [vmem:[%s771 + $0x38] sm:$0x1]
        %v798 = vsel %vm301, 0, %v797
        %799 = vst [vmem:[%s771 + $0x38] sm:$0x1] %v798
        %v800 = vld [vmem:[%s771 + $0x40] sm:$0x1]
        %v801 = vsel %vm301, 0, %v800
        %802 = vst [vmem:[%s771 + $0x40] sm:$0x1] %v801
        %v811 = vunpack.c.l.b16 %v763
        %v812 = vunpack.c.l.b16 %v764
        %v813 = vunpack.c.l.b16 %v765
        %v814 = vunpack.c.l.b16 %v766
        %v815 = vunpack.c.l.b16 %v767
        %v816 = vunpack.c.l.b16 %v768
        %v817 = vunpack.c.l.b16 %v769
        %v818 = vunpack.c.l.b16 %v770
        %v819 = vpack.c.b16 %v811, %v811
        %v820 = vpack.c.b16 %v812, %v812
        %v821 = vpack.c.b16 %v813, %v813
        %v822 = vpack.c.b16 %v814, %v814
        %v823 = vpack.c.b16 %v815, %v815
        %v824 = vpack.c.b16 %v816, %v816
        %v825 = vpack.c.b16 %v817, %v817
        %v826 = vpack.c.b16 %v818, %v818
        %v828 = vshrl.u32 %v819, 16
        %v830 = vrot.slane %v828, 7
        %v831 = vshll.u32 %v819, 16
        %v833 = vor.u32 %v830, %v831
        %v834 = vrot.slane %v830, 4
        %v836 = vshrl.u32 %v820, 16
        %v838 = vrot.slane %v836, 7
        %v839 = vshll.u32 %v820, 16
        %v841 = vor.u32 %v838, %v839
        %v842 = vrot.slane %v838, 4
        %v844 = vshrl.u32 %v821, 16
        %v846 = vrot.slane %v844, 7
        %v847 = vshll.u32 %v821, 16
        %v849 = vor.u32 %v846, %v847
        %v850 = vrot.slane %v846, 4
        %v852 = vshrl.u32 %v822, 16
        %v854 = vrot.slane %v852, 7
        %v855 = vshll.u32 %v822, 16
        %v857 = vor.u32 %v854, %v855
        %v858 = vrot.slane %v854, 4
        %v860 = vshrl.u32 %v823, 16
        %v862 = vrot.slane %v860, 7
        %v863 = vshll.u32 %v823, 16
        %v865 = vor.u32 %v862, %v863
        %v866 = vrot.slane %v862, 4
        %v868 = vshrl.u32 %v824, 16
        %v870 = vrot.slane %v868, 7
        %v871 = vshll.u32 %v824, 16
        %v873 = vor.u32 %v870, %v871
        %v874 = vrot.slane %v870, 4
        %v876 = vshrl.u32 %v825, 16
        %v878 = vrot.slane %v876, 7
        %v879 = vshll.u32 %v825, 16
        %v881 = vor.u32 %v878, %v879
        %v882 = vrot.slane %v878, 4
        %v884 = vshrl.u32 %v826, 16
        %v886 = vrot.slane %v884, 7
        %v887 = vshll.u32 %v826, 16
        %v889 = vor.u32 %v886, %v887
        %v890 = vrot.slane %v886, 4
        %s907 = scalar_lea.vmem [#allocation2], 152
        %v908 = vld [vmem:[%s907] sm:$0xf]
        %v909 = vsel %vm439, %v833, %v908
        %910 = vst [vmem:[%s907] sm:$0xf] %v909
        %v911 = vld [vmem:[%s907 + $0x4] sm:$0x1]
        %v912 = vsel %vm301, %v834, %v911
        %913 = vst [vmem:[%s907 + $0x4] sm:$0x1] %v912
        %v914 = vld [vmem:[%s907 + $0x8] sm:$0xf]
        %v915 = vsel %vm439, %v841, %v914
        %916 = vst [vmem:[%s907 + $0x8] sm:$0xf] %v915
        %v917 = vld [vmem:[%s907 + $0xc] sm:$0x1]
        %v918 = vsel %vm301, %v842, %v917
        %919 = vst [vmem:[%s907 + $0xc] sm:$0x1] %v918
        %v920 = vld [vmem:[%s907 + $0x10] sm:$0xf]
        %v921 = vsel %vm439, %v849, %v920
        %922 = vst [vmem:[%s907 + $0x10] sm:$0xf] %v921
        %v923 = vld [vmem:[%s907 + $0x14] sm:$0x1]
        %v924 = vsel %vm301, %v850, %v923
        %925 = vst [vmem:[%s907 + $0x14] sm:$0x1] %v924
        %v926 = vld [vmem:[%s907 + $0x18] sm:$0xf]
        %v927 = vsel %vm439, %v857, %v926
        %928 = vst [vmem:[%s907 + $0x18] sm:$0xf] %v927
        %v929 = vld [vmem:[%s907 + $0x1c] sm:$0x1]
        %v930 = vsel %vm301, %v858, %v929
        %931 = vst [vmem:[%s907 + $0x1c] sm:$0x1] %v930
        %v932 = vld [vmem:[%s907 + $0x20] sm:$0xf]
        %v933 = vsel %vm439, %v865, %v932
        %934 = vst [vmem:[%s907 + $0x20] sm:$0xf] %v933
        %v935 = vld [vmem:[%s907 + $0x24] sm:$0x1]
        %v936 = vsel %vm301, %v866, %v935
        %937 = vst [vmem:[%s907 + $0x24] sm:$0x1] %v936
        %v938 = vld [vmem:[%s907 + $0x28] sm:$0xf]
        %v939 = vsel %vm439, %v873, %v938
        %940 = vst [vmem:[%s907 + $0x28] sm:$0xf] %v939
        %v941 = vld [vmem:[%s907 + $0x2c] sm:$0x1]
        %v942 = vsel %vm301, %v874, %v941
        %943 = vst [vmem:[%s907 + $0x2c] sm:$0x1] %v942
        %v944 = vld [vmem:[%s907 + $0x30] sm:$0xf]
        %v945 = vsel %vm439, %v881, %v944
        %946 = vst [vmem:[%s907 + $0x30] sm:$0xf] %v945
        %v947 = vld [vmem:[%s907 + $0x34] sm:$0x1]
        %v948 = vsel %vm301, %v882, %v947
        %949 = vst [vmem:[%s907 + $0x34] sm:$0x1] %v948
        %v950 = vld [vmem:[%s907 + $0x38] sm:$0xf]
        %v951 = vsel %vm439, %v889, %v950
        %952 = vst [vmem:[%s907 + $0x38] sm:$0xf] %v951
        %v953 = vld [vmem:[%s907 + $0x3c] sm:$0x1]
        %v954 = vsel %vm301, %v890, %v953
        %955 = vst [vmem:[%s907 + $0x3c] sm:$0x1] %v954
        %s956 = scalar_lea.vmem %s233, 96
        %v957 = vld [vmem:[%s956] sm:$0xf]
        %v958 = vld [vmem:[%s956 + $0x4] sm:$0xf]
        %v959 = vld [vmem:[%s956 + $0x8] sm:$0xf]
        %v960 = vld [vmem:[%s956 + $0xc] sm:$0xf]
        %v961 = vld [vmem:[%s956 + $0x10] sm:$0xf]
        %v962 = vld [vmem:[%s956 + $0x14] sm:$0xf]
        %v963 = vld [vmem:[%s956 + $0x18] sm:$0xf]
        %v964 = vld [vmem:[%s956 + $0x1c] sm:$0xf]
        %v965 = vunpack.c.l.bf16 %v957
        %v966 = vunpack.c.l.bf16 %v958
        %v967 = vunpack.c.l.bf16 %v959
        %v968 = vunpack.c.l.bf16 %v960
        %v969 = vunpack.c.l.bf16 %v961
        %v970 = vunpack.c.l.bf16 %v962
        %v971 = vunpack.c.l.bf16 %v963
        %v972 = vunpack.c.l.bf16 %v964
        %v973 = vmul.f32 %v965, %v257
        %v974 = vmul.f32 %v966, %v257
        %v975 = vmul.f32 %v967, %v257
        %v976 = vmul.f32 %v968, %v257
        %v977 = vmul.f32 %v969, %v257
        %v978 = vmul.f32 %v970, %v257
        %v979 = vmul.f32 %v971, %v257
        %v980 = vmul.f32 %v972, %v257
        %v981 = vadd.f32 %v973, %v271
        %v982 = vadd.f32 %v974, %v271
        %v983 = vadd.f32 %v975, %v271
        %v984 = vadd.f32 %v976, %v271
        %v985 = vadd.f32 %v977, %v271
        %v986 = vadd.f32 %v978, %v271
        %v987 = vadd.f32 %v979, %v271
        %v988 = vadd.f32 %v980, %v271
        %v989 = vmax.f32 %v981, 0.0
        %v990 = vmax.f32 %v982, 0.0
        %v991 = vmax.f32 %v983, 0.0
        %v992 = vmax.f32 %v984, 0.0
        %v993 = vmax.f32 %v985, 0.0
        %v994 = vmax.f32 %v986, 0.0
        %v995 = vmax.f32 %v987, 0.0
        %v996 = vmax.f32 %v988, 0.0
        %v997 = vpack.c.bf16 %v989, %v989
        %v998 = vpack.c.bf16 %v990, %v990
        %v999 = vpack.c.bf16 %v991, %v991
        %v1000 = vpack.c.bf16 %v992, %v992
        %v1001 = vpack.c.bf16 %v993, %v993
        %v1002 = vpack.c.bf16 %v994, %v994
        %v1003 = vpack.c.bf16 %v995, %v995
        %v1004 = vpack.c.bf16 %v996, %v996
        %s1005 = scalar_lea.vmem [#allocation2], 216
        %1006 = vst.msk [vmem:[%s1005] sm:$0xf] %vm297, 0
        %v1007 = vld [vmem:[%s1005 + $0x4] sm:$0x1]
        %v1008 = vsel %vm301, 0, %v1007
        %1009 = vst [vmem:[%s1005 + $0x4] sm:$0x1] %v1008
        %v1010 = vld [vmem:[%s1005] sm:$0x1]
        %v1011 = vsel %vm301, 0, %v1010
        %1012 = vst [vmem:[%s1005] sm:$0x1] %v1011
        %v1013 = vld [vmem:[%s1005 + $0x8] sm:$0x1]
        %v1014 = vsel %vm301, 0, %v1013
        %1015 = vst [vmem:[%s1005 + $0x8] sm:$0x1] %v1014
        %v1016 = vld [vmem:[%s1005 + $0x10] sm:$0x1]
        %v1017 = vsel %vm301, 0, %v1016
        %1018 = vst [vmem:[%s1005 + $0x10] sm:$0x1] %v1017
        %v1019 = vld [vmem:[%s1005 + $0x18] sm:$0x1]
        %v1020 = vsel %vm301, 0, %v1019
        %1021 = vst [vmem:[%s1005 + $0x18] sm:$0x1] %v1020
        %v1022 = vld [vmem:[%s1005 + $0x20] sm:$0x1]
        %v1023 = vsel %vm301, 0, %v1022
        %1024 = vst [vmem:[%s1005 + $0x20] sm:$0x1] %v1023
        %v1025 = vld [vmem:[%s1005 + $0x28] sm:$0x1]
        %v1026 = vsel %vm301, 0, %v1025
        %1027 = vst [vmem:[%s1005 + $0x28] sm:$0x1] %v1026
        %v1028 = vld [vmem:[%s1005 + $0x30] sm:$0x1]
        %v1029 = vsel %vm301, 0, %v1028
        %1030 = vst [vmem:[%s1005 + $0x30] sm:$0x1] %v1029
        %v1031 = vld [vmem:[%s1005 + $0x38] sm:$0x1]
        %v1032 = vsel %vm301, 0, %v1031
        %1033 = vst [vmem:[%s1005 + $0x38] sm:$0x1] %v1032
        %v1034 = vld [vmem:[%s1005 + $0x40] sm:$0x1]
        %v1035 = vsel %vm301, 0, %v1034
        %1036 = vst [vmem:[%s1005 + $0x40] sm:$0x1] %v1035
        %v1045 = vunpack.c.l.b16 %v997
        %v1046 = vunpack.c.l.b16 %v998
        %v1047 = vunpack.c.l.b16 %v999
        %v1048 = vunpack.c.l.b16 %v1000
        %v1049 = vunpack.c.l.b16 %v1001
        %v1050 = vunpack.c.l.b16 %v1002
        %v1051 = vunpack.c.l.b16 %v1003
        %v1052 = vunpack.c.l.b16 %v1004
        %v1053 = vpack.c.b16 %v1045, %v1045
        %v1054 = vpack.c.b16 %v1046, %v1046
        %v1055 = vpack.c.b16 %v1047, %v1047
        %v1056 = vpack.c.b16 %v1048, %v1048
        %v1057 = vpack.c.b16 %v1049, %v1049
        %v1058 = vpack.c.b16 %v1050, %v1050
        %v1059 = vpack.c.b16 %v1051, %v1051
        %v1060 = vpack.c.b16 %v1052, %v1052
        %v1062 = vshrl.u32 %v1053, 16
        %v1064 = vrot.slane %v1062, 7
        %v1065 = vshll.u32 %v1053, 16
        %v1067 = vor.u32 %v1064, %v1065
        %v1068 = vrot.slane %v1064, 4
        %v1070 = vshrl.u32 %v1054, 16
        %v1072 = vrot.slane %v1070, 7
        %v1073 = vshll.u32 %v1054, 16
        %v1075 = vor.u32 %v1072, %v1073
        %v1076 = vrot.slane %v1072, 4
        %v1078 = vshrl.u32 %v1055, 16
        %v1080 = vrot.slane %v1078, 7
        %v1081 = vshll.u32 %v1055, 16
        %v1083 = vor.u32 %v1080, %v1081
        %v1084 = vrot.slane %v1080, 4
        %v1086 = vshrl.u32 %v1056, 16
        %v1088 = vrot.slane %v1086, 7
        %v1089 = vshll.u32 %v1056, 16
        %v1091 = vor.u32 %v1088, %v1089
        %v1092 = vrot.slane %v1088, 4
        %v1094 = vshrl.u32 %v1057, 16
        %v1096 = vrot.slane %v1094, 7
        %v1097 = vshll.u32 %v1057, 16
        %v1099 = vor.u32 %v1096, %v1097
        %v1100 = vrot.slane %v1096, 4
        %v1102 = vshrl.u32 %v1058, 16
        %v1104 = vrot.slane %v1102, 7
        %v1105 = vshll.u32 %v1058, 16
        %v1107 = vor.u32 %v1104, %v1105
        %v1108 = vrot.slane %v1104, 4
        %v1110 = vshrl.u32 %v1059, 16
        %v1112 = vrot.slane %v1110, 7
        %v1113 = vshll.u32 %v1059, 16
        %v1115 = vor.u32 %v1112, %v1113
        %v1116 = vrot.slane %v1112, 4
        %v1118 = vshrl.u32 %v1060, 16
        %v1120 = vrot.slane %v1118, 7
        %v1121 = vshll.u32 %v1060, 16
        %v1123 = vor.u32 %v1120, %v1121
        %v1124 = vrot.slane %v1120, 4
        %s1141 = scalar_lea.vmem [#allocation2], 224
        %v1142 = vld [vmem:[%s1141] sm:$0xf]
        %v1143 = vsel %vm439, %v1067, %v1142
        %1144 = vst [vmem:[%s1141] sm:$0xf] %v1143
        %v1145 = vld [vmem:[%s1141 + $0x4] sm:$0x1]
        %v1146 = vsel %vm301, %v1068, %v1145
        %1147 = vst [vmem:[%s1141 + $0x4] sm:$0x1] %v1146
        %v1148 = vld [vmem:[%s1141 + $0x8] sm:$0xf]
        %v1149 = vsel %vm439, %v1075, %v1148
        %1150 = vst [vmem:[%s1141 + $0x8] sm:$0xf] %v1149
        %v1151 = vld [vmem:[%s1141 + $0xc] sm:$0x1]
        %v1152 = vsel %vm301, %v1076, %v1151
        %1153 = vst [vmem:[%s1141 + $0xc] sm:$0x1] %v1152
        %v1154 = vld [vmem:[%s1141 + $0x10] sm:$0xf]
        %v1155 = vsel %vm439, %v1083, %v1154
        %1156 = vst [vmem:[%s1141 + $0x10] sm:$0xf] %v1155
        %v1157 = vld [vmem:[%s1141 + $0x14] sm:$0x1]
        %v1158 = vsel %vm301, %v1084, %v1157
        %1159 = vst [vmem:[%s1141 + $0x14] sm:$0x1] %v1158
        %v1160 = vld [vmem:[%s1141 + $0x18] sm:$0xf]
        %v1161 = vsel %vm439, %v1091, %v1160
        %1162 = vst [vmem:[%s1141 + $0x18] sm:$0xf] %v1161
        %v1163 = vld [vmem:[%s1141 + $0x1c] sm:$0x1]
        %v1164 = vsel %vm301, %v1092, %v1163
        %1165 = vst [vmem:[%s1141 + $0x1c] sm:$0x1] %v1164
        %v1166 = vld [vmem:[%s1141 + $0x20] sm:$0xf]
        %v1167 = vsel %vm439, %v1099, %v1166
        %1168 = vst [vmem:[%s1141 + $0x20] sm:$0xf] %v1167
        %v1169 = vld [vmem:[%s1141 + $0x24] sm:$0x1]
        %v1170 = vsel %vm301, %v1100, %v1169
        %1171 = vst [vmem:[%s1141 + $0x24] sm:$0x1] %v1170
        %v1172 = vld [vmem:[%s1141 + $0x28] sm:$0xf]
        %v1173 = vsel %vm439, %v1107, %v1172
        %1174 = vst [vmem:[%s1141 + $0x28] sm:$0xf] %v1173
        %v1175 = vld [vmem:[%s1141 + $0x2c] sm:$0x1]
        %v1176 = vsel %vm301, %v1108, %v1175
        %1177 = vst [vmem:[%s1141 + $0x2c] sm:$0x1] %v1176
        %v1178 = vld [vmem:[%s1141 + $0x30] sm:$0xf]
        %v1179 = vsel %vm439, %v1115, %v1178
        %1180 = vst [vmem:[%s1141 + $0x30] sm:$0xf] %v1179
        %v1181 = vld [vmem:[%s1141 + $0x34] sm:$0x1]
        %v1182 = vsel %vm301, %v1116, %v1181
        %1183 = vst [vmem:[%s1141 + $0x34] sm:$0x1] %v1182
        %v1184 = vld [vmem:[%s1141 + $0x38] sm:$0xf]
        %v1185 = vsel %vm439, %v1123, %v1184
        %1186 = vst [vmem:[%s1141 + $0x38] sm:$0xf] %v1185
        %v1187 = vld [vmem:[%s1141 + $0x3c] sm:$0x1]
        %v1188 = vsel %vm301, %v1124, %v1187
        %1189 = vst [vmem:[%s1141 + $0x3c] sm:$0x1] %v1188
        %v1190 = vld [vmem:[%s1005] sm:$0xf]
        %v1191 = vld [vmem:[%s1005 + $0x8] sm:$0xf]
        %v1192 = vld [vmem:[%s1005 + $0x10] sm:$0xf]
        %v1193 = vld [vmem:[%s1005 + $0x18] sm:$0xf]
        %v1194 = vld [vmem:[%s1005 + $0x20] sm:$0xf]
        %v1195 = vld [vmem:[%s1005 + $0x28] sm:$0xf]
        %v1196 = vld [vmem:[%s1005 + $0x30] sm:$0xf]
        %v1197 = vld [vmem:[%s1005 + $0x38] sm:$0xf]
        %1198 = vst.msk [vmem:[#allocation3] sm:$0xf] %vm297, %v1190
        %1199 = vst.msk [vmem:[#allocation3 + $0x4] sm:$0xf] %vm297, %v1191
        %1200 = vst.msk [vmem:[#allocation3 + $0x8] sm:$0xf] %vm297, %v1192
        %1201 = vst.msk [vmem:[#allocation3 + $0xc] sm:$0xf] %vm297, %v1193
        %1202 = vst.msk [vmem:[#allocation3 + $0x10] sm:$0xf] %vm297, %v1194
        %1203 = vst.msk [vmem:[#allocation3 + $0x14] sm:$0xf] %vm297, %v1195
        %1204 = vst.msk [vmem:[#allocation3 + $0x18] sm:$0xf] %vm297, %v1196
        %1205 = vst.msk [vmem:[#allocation3 + $0x1c] sm:$0xf] %vm297, %v1197
        %v1206 = vld [vmem:[%s771] sm:$0xf]
        %v1207 = vld [vmem:[%s771 + $0x4] sm:$0x1]
        %v1208 = vld [vmem:[%s771 + $0x8] sm:$0xf]
        %v1209 = vld [vmem:[%s771 + $0xc] sm:$0x1]
        %v1210 = vld [vmem:[%s771 + $0x10] sm:$0xf]
        %v1211 = vld [vmem:[%s771 + $0x14] sm:$0x1]
        %v1212 = vld [vmem:[%s771 + $0x18] sm:$0xf]
        %v1213 = vld [vmem:[%s771 + $0x1c] sm:$0x1]
        %v1214 = vld [vmem:[%s771 + $0x20] sm:$0xf]
        %v1215 = vld [vmem:[%s771 + $0x24] sm:$0x1]
        %v1216 = vld [vmem:[%s771 + $0x28] sm:$0xf]
        %v1217 = vld [vmem:[%s771 + $0x2c] sm:$0x1]
        %v1218 = vld [vmem:[%s771 + $0x30] sm:$0xf]
        %v1219 = vld [vmem:[%s771 + $0x34] sm:$0x1]
        %v1220 = vld [vmem:[%s771 + $0x38] sm:$0xf]
        %v1221 = vld [vmem:[%s771 + $0x3c] sm:$0x1]
        %vm1222 = vsmask.f32 3328
        %vm1223 = vsmask.f32 7440
        %vm1224 = vmor %vm1222, %vm1223
        %v1226 = vshrl.u32 %v1206, 16
        %v1228 = vrot.slane %v1226, 4
        %v1229 = vshll.u32 %v1206, 16
        %v1231 = vrot.slane %v1229, 5
        %v1232 = vor.u32 %v1228, %v1231
        %v1233 = vrot.slane %v1232, 4
        %v1235 = vshll.u32 %v1207, 16
        %v1237 = vrot.slane %v1235, 5
        %v1238 = vsel %vm1224, %v1233, %v1237
        %v1240 = vshrl.u32 %v1208, 16
        %v1242 = vrot.slane %v1240, 4
        %v1243 = vshll.u32 %v1208, 16
        %v1245 = vrot.slane %v1243, 5
        %v1246 = vor.u32 %v1242, %v1245
        %v1247 = vrot.slane %v1246, 4
        %v1249 = vshll.u32 %v1209, 16
        %v1251 = vrot.slane %v1249, 5
        %v1252 = vsel %vm1224, %v1247, %v1251
        %v1254 = vshrl.u32 %v1210, 16
        %v1256 = vrot.slane %v1254, 4
        %v1257 = vshll.u32 %v1210, 16
        %v1259 = vrot.slane %v1257, 5
        %v1260 = vor.u32 %v1256, %v1259
        %v1261 = vrot.slane %v1260, 4
        %v1263 = vshll.u32 %v1211, 16
        %v1265 = vrot.slane %v1263, 5
        %v1266 = vsel %vm1224, %v1261, %v1265
        %v1268 = vshrl.u32 %v1212, 16
        %v1270 = vrot.slane %v1268, 4
        %v1271 = vshll.u32 %v1212, 16
        %v1273 = vrot.slane %v1271, 5
        %v1274 = vor.u32 %v1270, %v1273
        %v1275 = vrot.slane %v1274, 4
        %v1277 = vshll.u32 %v1213, 16
        %v1279 = vrot.slane %v1277, 5
        %v1280 = vsel %vm1224, %v1275, %v1279
        %v1282 = vshrl.u32 %v1214, 16
        %v1284 = vrot.slane %v1282, 4
        %v1285 = vshll.u32 %v1214, 16
        %v1287 = vrot.slane %v1285, 5
        %v1288 = vor.u32 %v1284, %v1287
        %v1289 = vrot.slane %v1288, 4
        %v1291 = vshll.u32 %v1215, 16
        %v1293 = vrot.slane %v1291, 5
        %v1294 = vsel %vm1224, %v1289, %v1293
        %v1296 = vshrl.u32 %v1216, 16
        %v1298 = vrot.slane %v1296, 4
        %v1299 = vshll.u32 %v1216, 16
        %v1301 = vrot.slane %v1299, 5
        %v1302 = vor.u32 %v1298, %v1301
        %v1303 = vrot.slane %v1302, 4
        %v1305 = vshll.u32 %v1217, 16
        %v1307 = vrot.slane %v1305, 5
        %v1308 = vsel %vm1224, %v1303, %v1307
        %v1310 = vshrl.u32 %v1218, 16
        %v1312 = vrot.slane %v1310, 4
        %v1313 = vshll.u32 %v1218, 16
        %v1315 = vrot.slane %v1313, 5
        %v1316 = vor.u32 %v1312, %v1315
        %v1317 = vrot.slane %v1316, 4
        %v1319 = vshll.u32 %v1219, 16
        %v1321 = vrot.slane %v1319, 5
        %v1322 = vsel %vm1224, %v1317, %v1321
        %v1324 = vshrl.u32 %v1220, 16
        %v1326 = vrot.slane %v1324, 4
        %v1327 = vshll.u32 %v1220, 16
        %v1329 = vrot.slane %v1327, 5
        %v1330 = vor.u32 %v1326, %v1329
        %v1331 = vrot.slane %v1330, 4
        %v1333 = vshll.u32 %v1221, 16
        %v1335 = vrot.slane %v1333, 5
        %v1336 = vsel %vm1224, %v1331, %v1335
        %1337 = vrot.lane.b32.xlu0 %v1238, 4
        %v1338 = vpop.permute.xlu0 %1337
        %1339 = vrot.lane.b32.xlu0 %v1252, 4
        %v1340 = vpop.permute.xlu0 %1339
        %1341 = vrot.lane.b32.xlu0 %v1266, 4
        %v1342 = vpop.permute.xlu0 %1341
        %1343 = vrot.lane.b32.xlu0 %v1280, 4
        %v1344 = vpop.permute.xlu0 %1343
        %1345 = vrot.lane.b32.xlu0 %v1294, 4
        %v1346 = vpop.permute.xlu0 %1345
        %1347 = vrot.lane.b32.xlu0 %v1308, 4
        %v1348 = vpop.permute.xlu0 %1347
        %1349 = vrot.lane.b32.xlu0 %v1322, 4
        %v1350 = vpop.permute.xlu0 %1349
        %1351 = vrot.lane.b32.xlu0 %v1336, 4
        %v1352 = vpop.permute.xlu0 %1351
        %vm1361 = vcmask 60448
        %1362 = vst.msk [vmem:[#allocation3] sm:$0xf] %vm1361, %v1338
        %1363 = vst.msk [vmem:[#allocation3 + $0x4] sm:$0xf] %vm1361, %v1340
        %1364 = vst.msk [vmem:[#allocation3 + $0x8] sm:$0xf] %vm1361, %v1342
        %1365 = vst.msk [vmem:[#allocation3 + $0xc] sm:$0xf] %vm1361, %v1344
        %1366 = vst.msk [vmem:[#allocation3 + $0x10] sm:$0xf] %vm1361, %v1346
        %1367 = vst.msk [vmem:[#allocation3 + $0x14] sm:$0xf] %vm1361, %v1348
        %1368 = vst.msk [vmem:[#allocation3 + $0x18] sm:$0xf] %vm1361, %v1350
        %1369 = vst.msk [vmem:[#allocation3 + $0x1c] sm:$0xf] %vm1361, %v1352
        %v1370 = vld [vmem:[%s1005] sm:$0xf]
        %v1371 = vld [vmem:[%s1005 + $0x4] sm:$0x1]
        %v1372 = vld [vmem:[%s1005 + $0x8] sm:$0xf]
        %v1373 = vld [vmem:[%s1005 + $0xc] sm:$0x1]
        %v1374 = vld [vmem:[%s1005 + $0x10] sm:$0xf]
        %v1375 = vld [vmem:[%s1005 + $0x14] sm:$0x1]
        %v1376 = vld [vmem:[%s1005 + $0x18] sm:$0xf]
        %v1377 = vld [vmem:[%s1005 + $0x1c] sm:$0x1]
        %v1378 = vld [vmem:[%s1005 + $0x20] sm:$0xf]
        %v1379 = vld [vmem:[%s1005 + $0x24] sm:$0x1]
        %v1380 = vld [vmem:[%s1005 + $0x28] sm:$0xf]
        %v1381 = vld [vmem:[%s1005 + $0x2c] sm:$0x1]
        %v1382 = vld [vmem:[%s1005 + $0x30] sm:$0xf]
        %v1383 = vld [vmem:[%s1005 + $0x34] sm:$0x1]
        %v1384 = vld [vmem:[%s1005 + $0x38] sm:$0xf]
        %v1385 = vld [vmem:[%s1005 + $0x3c] sm:$0x1]
        %v1387 = vshrl.u32 %v1370, 16
        %v1389 = vrot.slane %v1387, 4
        %v1390 = vshll.u32 %v1370, 16
        %v1392 = vrot.slane %v1390, 5
        %v1393 = vor.u32 %v1389, %v1392
        %v1394 = vrot.slane %v1393, 4
        %v1396 = vshll.u32 %v1371, 16
        %v1398 = vrot.slane %v1396, 5
        %v1399 = vsel %vm1224, %v1394, %v1398
        %v1401 = vshrl.u32 %v1372, 16
        %v1403 = vrot.slane %v1401, 4
        %v1404 = vshll.u32 %v1372, 16
        %v1406 = vrot.slane %v1404, 5
        %v1407 = vor.u32 %v1403, %v1406
        %v1408 = vrot.slane %v1407, 4
        %v1410 = vshll.u32 %v1373, 16
        %v1412 = vrot.slane %v1410, 5
        %v1413 = vsel %vm1224, %v1408, %v1412
        %v1415 = vshrl.u32 %v1374, 16
        %v1417 = vrot.slane %v1415, 4
        %v1418 = vshll.u32 %v1374, 16
        %v1420 = vrot.slane %v1418, 5
        %v1421 = vor.u32 %v1417, %v1420
        %v1422 = vrot.slane %v1421, 4
        %v1424 = vshll.u32 %v1375, 16
        %v1426 = vrot.slane %v1424, 5
        %v1427 = vsel %vm1224, %v1422, %v1426
        %v1429 = vshrl.u32 %v1376, 16
        %v1431 = vrot.slane %v1429, 4
        %v1432 = vshll.u32 %v1376, 16
        %v1434 = vrot.slane %v1432, 5
        %v1435 = vor.u32 %v1431, %v1434
        %v1436 = vrot.slane %v1435, 4
        %v1438 = vshll.u32 %v1377, 16
        %v1440 = vrot.slane %v1438, 5
        %v1441 = vsel %vm1224, %v1436, %v1440
        %v1443 = vshrl.u32 %v1378, 16
        %v1445 = vrot.slane %v1443, 4
        %v1446 = vshll.u32 %v1378, 16
        %v1448 = vrot.slane %v1446, 5
        %v1449 = vor.u32 %v1445, %v1448
        %v1450 = vrot.slane %v1449, 4
        %v1452 = vshll.u32 %v1379, 16
        %v1454 = vrot.slane %v1452, 5
        %v1455 = vsel %vm1224, %v1450, %v1454
        %v1457 = vshrl.u32 %v1380, 16
        %v1459 = vrot.slane %v1457, 4
        %v1460 = vshll.u32 %v1380, 16
        %v1462 = vrot.slane %v1460, 5
        %v1463 = vor.u32 %v1459, %v1462
        %v1464 = vrot.slane %v1463, 4
        %v1466 = vshll.u32 %v1381, 16
        %v1468 = vrot.slane %v1466, 5
        %v1469 = vsel %vm1224, %v1464, %v1468
        %v1471 = vshrl.u32 %v1382, 16
        %v1473 = vrot.slane %v1471, 4
        %v1474 = vshll.u32 %v1382, 16
        %v1476 = vrot.slane %v1474, 5
        %v1477 = vor.u32 %v1473, %v1476
        %v1478 = vrot.slane %v1477, 4
        %v1480 = vshll.u32 %v1383, 16
        %v1482 = vrot.slane %v1480, 5
        %v1483 = vsel %vm1224, %v1478, %v1482
        %v1485 = vshrl.u32 %v1384, 16
        %v1487 = vrot.slane %v1485, 4
        %v1488 = vshll.u32 %v1384, 16
        %v1490 = vrot.slane %v1488, 5
        %v1491 = vor.u32 %v1487, %v1490
        %v1492 = vrot.slane %v1491, 4
        %v1494 = vshll.u32 %v1385, 16
        %v1496 = vrot.slane %v1494, 5
        %v1497 = vsel %vm1224, %v1492, %v1496
        %1498 = vrot.lane.b32.xlu0 %v1399, 8
        %v1499 = vpop.permute.xlu0 %1498
        %1500 = vrot.lane.b32.xlu0 %v1413, 8
        %v1501 = vpop.permute.xlu0 %1500
        %1502 = vrot.lane.b32.xlu0 %v1427, 8
        %v1503 = vpop.permute.xlu0 %1502
        %1504 = vrot.lane.b32.xlu0 %v1441, 8
        %v1505 = vpop.permute.xlu0 %1504
        %1506 = vrot.lane.b32.xlu0 %v1455, 8
        %v1507 = vpop.permute.xlu0 %1506
        %1508 = vrot.lane.b32.xlu0 %v1469, 8
        %v1509 = vpop.permute.xlu0 %1508
        %1510 = vrot.lane.b32.xlu0 %v1483, 8
        %v1511 = vpop.permute.xlu0 %1510
        %1512 = vrot.lane.b32.xlu0 %v1497, 8
        %v1513 = vpop.permute.xlu0 %1512
        %vm1522 = vcmask 93248
        %1523 = vst.msk [vmem:[#allocation3] sm:$0xf] %vm1522, %v1499
        %1524 = vst.msk [vmem:[#allocation3 + $0x4] sm:$0xf] %vm1522, %v1501
        %1525 = vst.msk [vmem:[#allocation3 + $0x8] sm:$0xf] %vm1522, %v1503
        %1526 = vst.msk [vmem:[#allocation3 + $0xc] sm:$0xf] %vm1522, %v1505
        %1527 = vst.msk [vmem:[#allocation3 + $0x10] sm:$0xf] %vm1522, %v1507
        %1528 = vst.msk [vmem:[#allocation3 + $0x14] sm:$0xf] %vm1522, %v1509
        %1529 = vst.msk [vmem:[#allocation3 + $0x18] sm:$0xf] %vm1522, %v1511
        %1530 = vst.msk [vmem:[#allocation3 + $0x1c] sm:$0xf] %vm1522, %v1513
        %v1531 = vld [vmem:[%s673] sm:$0xf]
        %v1532 = vld [vmem:[%s673 + $0x8] sm:$0xf]
        %v1533 = vld [vmem:[%s673 + $0x10] sm:$0xf]
        %v1534 = vld [vmem:[%s673 + $0x18] sm:$0xf]
        %v1535 = vld [vmem:[%s673 + $0x20] sm:$0xf]
        %v1536 = vld [vmem:[%s673 + $0x28] sm:$0xf]
        %v1537 = vld [vmem:[%s673 + $0x30] sm:$0xf]
        %v1538 = vld [vmem:[%s673 + $0x38] sm:$0xf]
        %1547 = vrot.lane.b32.xlu0 %v1531, 12
        %v1548 = vpop.permute.xlu0 %1547
        %1549 = vrot.lane.b32.xlu0 %v1532, 12
        %v1550 = vpop.permute.xlu0 %1549
        %1551 = vrot.lane.b32.xlu0 %v1533, 12
        %v1552 = vpop.permute.xlu0 %1551
        %1553 = vrot.lane.b32.xlu0 %v1534, 12
        %v1554 = vpop.permute.xlu0 %1553
        %1555 = vrot.lane.b32.xlu0 %v1535, 12
        %v1556 = vpop.permute.xlu0 %1555
        %1557 = vrot.lane.b32.xlu0 %v1536, 12
        %v1558 = vpop.permute.xlu0 %1557
        %1559 = vrot.lane.b32.xlu0 %v1537, 12
        %v1560 = vpop.permute.xlu0 %1559
        %1561 = vrot.lane.b32.xlu0 %v1538, 12
        %v1562 = vpop.permute.xlu0 %1561
        %vm1571 = vcmask 126048
        %1572 = vst.msk [vmem:[#allocation3] sm:$0xf] %vm1571, %v1548
        %1573 = vst.msk [vmem:[#allocation3 + $0x4] sm:$0xf] %vm1571, %v1550
        %1574 = vst.msk [vmem:[#allocation3 + $0x8] sm:$0xf] %vm1571, %v1552
        %1575 = vst.msk [vmem:[#allocation3 + $0xc] sm:$0xf] %vm1571, %v1554
        %1576 = vst.msk [vmem:[#allocation3 + $0x10] sm:$0xf] %vm1571, %v1556
        %1577 = vst.msk [vmem:[#allocation3 + $0x14] sm:$0xf] %vm1571, %v1558
        %1578 = vst.msk [vmem:[#allocation3 + $0x18] sm:$0xf] %vm1571, %v1560
        %1579 = vst.msk [vmem:[#allocation3 + $0x1c] sm:$0xf] %vm1571, %v1562
        %v1580 = vld [vmem:[%s436] sm:$0xf]
        %v1581 = vld [vmem:[%s436 + $0x4] sm:$0x1]
        %v1582 = vld [vmem:[%s436 + $0x8] sm:$0xf]
        %v1583 = vld [vmem:[%s436 + $0xc] sm:$0x1]
        %v1584 = vld [vmem:[%s436 + $0x10] sm:$0xf]
        %v1585 = vld [vmem:[%s436 + $0x14] sm:$0x1]
        %v1586 = vld [vmem:[%s436 + $0x18] sm:$0xf]
        %v1587 = vld [vmem:[%s436 + $0x1c] sm:$0x1]
        %v1588 = vld [vmem:[%s436 + $0x20] sm:$0xf]
        %v1589 = vld [vmem:[%s436 + $0x24] sm:$0x1]
        %v1590 = vld [vmem:[%s436 + $0x28] sm:$0xf]
        %v1591 = vld [vmem:[%s436 + $0x2c] sm:$0x1]
        %v1592 = vld [vmem:[%s436 + $0x30] sm:$0xf]
        %v1593 = vld [vmem:[%s436 + $0x34] sm:$0x1]
        %v1594 = vld [vmem:[%s436 + $0x38] sm:$0xf]
        %v1595 = vld [vmem:[%s436 + $0x3c] sm:$0x1]
        %v1597 = vshrl.u32 %v1580, 16
        %v1599 = vrot.slane %v1597, 4
        %v1600 = vshll.u32 %v1580, 16
        %v1602 = vrot.slane %v1600, 5
        %v1603 = vor.u32 %v1599, %v1602
        %v1604 = vrot.slane %v1603, 4
        %v1606 = vshll.u32 %v1581, 16
        %v1608 = vrot.slane %v1606, 5
        %v1609 = vsel %vm1224, %v1604, %v1608
        %v1611 = vshrl.u32 %v1582, 16
        %v1613 = vrot.slane %v1611, 4
        %v1614 = vshll.u32 %v1582, 16
        %v1616 = vrot.slane %v1614, 5
        %v1617 = vor.u32 %v1613, %v1616
        %v1618 = vrot.slane %v1617, 4
        %v1620 = vshll.u32 %v1583, 16
        %v1622 = vrot.slane %v1620, 5
        %v1623 = vsel %vm1224, %v1618, %v1622
        %v1625 = vshrl.u32 %v1584, 16
        %v1627 = vrot.slane %v1625, 4
        %v1628 = vshll.u32 %v1584, 16
        %v1630 = vrot.slane %v1628, 5
        %v1631 = vor.u32 %v1627, %v1630
        %v1632 = vrot.slane %v1631, 4
        %v1634 = vshll.u32 %v1585, 16
        %v1636 = vrot.slane %v1634, 5
        %v1637 = vsel %vm1224, %v1632, %v1636
        %v1639 = vshrl.u32 %v1586, 16
        %v1641 = vrot.slane %v1639, 4
        %v1642 = vshll.u32 %v1586, 16
        %v1644 = vrot.slane %v1642, 5
        %v1645 = vor.u32 %v1641, %v1644
        %v1646 = vrot.slane %v1645, 4
        %v1648 = vshll.u32 %v1587, 16
        %v1650 = vrot.slane %v1648, 5
        %v1651 = vsel %vm1224, %v1646, %v1650
        %v1653 = vshrl.u32 %v1588, 16
        %v1655 = vrot.slane %v1653, 4
        %v1656 = vshll.u32 %v1588, 16
        %v1658 = vrot.slane %v1656, 5
        %v1659 = vor.u32 %v1655, %v1658
        %v1660 = vrot.slane %v1659, 4
        %v1662 = vshll.u32 %v1589, 16
        %v1664 = vrot.slane %v1662, 5
        %v1665 = vsel %vm1224, %v1660, %v1664
        %v1667 = vshrl.u32 %v1590, 16
        %v1669 = vrot.slane %v1667, 4
        %v1670 = vshll.u32 %v1590, 16
        %v1672 = vrot.slane %v1670, 5
        %v1673 = vor.u32 %v1669, %v1672
        %v1674 = vrot.slane %v1673, 4
        %v1676 = vshll.u32 %v1591, 16
        %v1678 = vrot.slane %v1676, 5
        %v1679 = vsel %vm1224, %v1674, %v1678
        %v1681 = vshrl.u32 %v1592, 16
        %v1683 = vrot.slane %v1681, 4
        %v1684 = vshll.u32 %v1592, 16
        %v1686 = vrot.slane %v1684, 5
        %v1687 = vor.u32 %v1683, %v1686
        %v1688 = vrot.slane %v1687, 4
        %v1690 = vshll.u32 %v1593, 16
        %v1692 = vrot.slane %v1690, 5
        %v1693 = vsel %vm1224, %v1688, %v1692
        %v1695 = vshrl.u32 %v1594, 16
        %v1697 = vrot.slane %v1695, 4
        %v1698 = vshll.u32 %v1594, 16
        %v1700 = vrot.slane %v1698, 5
        %v1701 = vor.u32 %v1697, %v1700
        %v1702 = vrot.slane %v1701, 4
        %v1704 = vshll.u32 %v1595, 16
        %v1706 = vrot.slane %v1704, 5
        %v1707 = vsel %vm1224, %v1702, %v1706
        %1708 = vrot.lane.b32.xlu0 %v1609, 16
        %v1709 = vpop.permute.xlu0 %1708
        %1710 = vrot.lane.b32.xlu0 %v1623, 16
        %v1711 = vpop.permute.xlu0 %1710
        %1712 = vrot.lane.b32.xlu0 %v1637, 16
        %v1713 = vpop.permute.xlu0 %1712
        %1714 = vrot.lane.b32.xlu0 %v1651, 16
        %v1715 = vpop.permute.xlu0 %1714
        %1716 = vrot.lane.b32.xlu0 %v1665, 16
        %v1717 = vpop.permute.xlu0 %1716
        %1718 = vrot.lane.b32.xlu0 %v1679, 16
        %v1719 = vpop.permute.xlu0 %1718
        %1720 = vrot.lane.b32.xlu0 %v1693, 16
        %v1721 = vpop.permute.xlu0 %1720
        %1722 = vrot.lane.b32.xlu0 %v1707, 16
        %v1723 = vpop.permute.xlu0 %1722
        %vm1732 = vcmask 158848
        %1733 = vst.msk [vmem:[#allocation3] sm:$0xf] %vm1732, %v1709
        %1734 = vst.msk [vmem:[#allocation3 + $0x4] sm:$0xf] %vm1732, %v1711
        %1735 = vst.msk [vmem:[#allocation3 + $0x8] sm:$0xf] %vm1732, %v1713
        %1736 = vst.msk [vmem:[#allocation3 + $0xc] sm:$0xf] %vm1732, %v1715
        %1737 = vst.msk [vmem:[#allocation3 + $0x10] sm:$0xf] %vm1732, %v1717
        %1738 = vst.msk [vmem:[#allocation3 + $0x14] sm:$0xf] %vm1732, %v1719
        %1739 = vst.msk [vmem:[#allocation3 + $0x18] sm:$0xf] %vm1732, %v1721
        %1740 = vst.msk [vmem:[#allocation3 + $0x1c] sm:$0xf] %vm1732, %v1723
        %v1741 = vld [vmem:[%s673] sm:$0xf]
        %v1742 = vld [vmem:[%s673 + $0x4] sm:$0x1]
        %v1743 = vld [vmem:[%s673 + $0x8] sm:$0xf]
        %v1744 = vld [vmem:[%s673 + $0xc] sm:$0x1]
        %v1745 = vld [vmem:[%s673 + $0x10] sm:$0xf]
        %v1746 = vld [vmem:[%s673 + $0x14] sm:$0x1]
        %v1747 = vld [vmem:[%s673 + $0x18] sm:$0xf]
        %v1748 = vld [vmem:[%s673 + $0x1c] sm:$0x1]
        %v1749 = vld [vmem:[%s673 + $0x20] sm:$0xf]
        %v1750 = vld [vmem:[%s673 + $0x24] sm:$0x1]
        %v1751 = vld [vmem:[%s673 + $0x28] sm:$0xf]
        %v1752 = vld [vmem:[%s673 + $0x2c] sm:$0x1]
        %v1753 = vld [vmem:[%s673 + $0x30] sm:$0xf]
        %v1754 = vld [vmem:[%s673 + $0x34] sm:$0x1]
        %v1755 = vld [vmem:[%s673 + $0x38] sm:$0xf]
        %v1756 = vld [vmem:[%s673 + $0x3c] sm:$0x1]
        %v1758 = vshrl.u32 %v1741, 16
        %v1760 = vrot.slane %v1758, 4
        %v1761 = vshll.u32 %v1741, 16
        %v1763 = vrot.slane %v1761, 5
        %v1764 = vor.u32 %v1760, %v1763
        %v1765 = vrot.slane %v1764, 4
        %v1767 = vshll.u32 %v1742, 16
        %v1769 = vrot.slane %v1767, 5
        %v1770 = vsel %vm1224, %v1765, %v1769
        %v1772 = vshrl.u32 %v1743, 16
        %v1774 = vrot.slane %v1772, 4
        %v1775 = vshll.u32 %v1743, 16
        %v1777 = vrot.slane %v1775, 5
        %v1778 = vor.u32 %v1774, %v1777
        %v1779 = vrot.slane %v1778, 4
        %v1781 = vshll.u32 %v1744, 16
        %v1783 = vrot.slane %v1781, 5
        %v1784 = vsel %vm1224, %v1779, %v1783
        %v1786 = vshrl.u32 %v1745, 16
        %v1788 = vrot.slane %v1786, 4
        %v1789 = vshll.u32 %v1745, 16
        %v1791 = vrot.slane %v1789, 5
        %v1792 = vor.u32 %v1788, %v1791
        %v1793 = vrot.slane %v1792, 4
        %v1795 = vshll.u32 %v1746, 16
        %v1797 = vrot.slane %v1795, 5
        %v1798 = vsel %vm1224, %v1793, %v1797
        %v1800 = vshrl.u32 %v1747, 16
        %v1802 = vrot.slane %v1800, 4
        %v1803 = vshll.u32 %v1747, 16
        %v1805 = vrot.slane %v1803, 5
        %v1806 = vor.u32 %v1802, %v1805
        %v1807 = vrot.slane %v1806, 4
        %v1809 = vshll.u32 %v1748, 16
        %v1811 = vrot.slane %v1809, 5
        %v1812 = vsel %vm1224, %v1807, %v1811
        %v1814 = vshrl.u32 %v1749, 16
        %v1816 = vrot.slane %v1814, 4
        %v1817 = vshll.u32 %v1749, 16
        %v1819 = vrot.slane %v1817, 5
        %v1820 = vor.u32 %v1816, %v1819
        %v1821 = vrot.slane %v1820, 4
        %v1823 = vshll.u32 %v1750, 16
        %v1825 = vrot.slane %v1823, 5
        %v1826 = vsel %vm1224, %v1821, %v1825
        %v1828 = vshrl.u32 %v1751, 16
        %v1830 = vrot.slane %v1828, 4
        %v1831 = vshll.u32 %v1751, 16
        %v1833 = vrot.slane %v1831, 5
        %v1834 = vor.u32 %v1830, %v1833
        %v1835 = vrot.slane %v1834, 4
        %v1837 = vshll.u32 %v1752, 16
        %v1839 = vrot.slane %v1837, 5
        %v1840 = vsel %vm1224, %v1835, %v1839
        %v1842 = vshrl.u32 %v1753, 16
        %v1844 = vrot.slane %v1842, 4
        %v1845 = vshll.u32 %v1753, 16
        %v1847 = vrot.slane %v1845, 5
        %v1848 = vor.u32 %v1844, %v1847
        %v1849 = vrot.slane %v1848, 4
        %v1851 = vshll.u32 %v1754, 16
        %v1853 = vrot.slane %v1851, 5
        %v1854 = vsel %vm1224, %v1849, %v1853
        %v1856 = vshrl.u32 %v1755, 16
        %v1858 = vrot.slane %v1856, 4
        %v1859 = vshll.u32 %v1755, 16
        %v1861 = vrot.slane %v1859, 5
        %v1862 = vor.u32 %v1858, %v1861
        %v1863 = vrot.slane %v1862, 4
        %v1865 = vshll.u32 %v1756, 16
        %v1867 = vrot.slane %v1865, 5
        %v1868 = vsel %vm1224, %v1863, %v1867
        %1869 = vrot.lane.b32.xlu0 %v1770, 20
        %v1870 = vpop.permute.xlu0 %1869
        %1871 = vrot.lane.b32.xlu0 %v1784, 20
        %v1872 = vpop.permute.xlu0 %1871
        %1873 = vrot.lane.b32.xlu0 %v1798, 20
        %v1874 = vpop.permute.xlu0 %1873
        %1875 = vrot.lane.b32.xlu0 %v1812, 20
        %v1876 = vpop.permute.xlu0 %1875
        %1877 = vrot.lane.b32.xlu0 %v1826, 20
        %v1878 = vpop.permute.xlu0 %1877
        %1879 = vrot.lane.b32.xlu0 %v1840, 20
        %v1880 = vpop.permute.xlu0 %1879
        %1881 = vrot.lane.b32.xlu0 %v1854, 20
        %v1882 = vpop.permute.xlu0 %1881
        %1883 = vrot.lane.b32.xlu0 %v1868, 20
        %v1884 = vpop.permute.xlu0 %1883
        %vm1893 = vcmask 191648
        %1894 = vst.msk [vmem:[#allocation3] sm:$0xf] %vm1893, %v1870
        %1895 = vst.msk [vmem:[#allocation3 + $0x4] sm:$0xf] %vm1893, %v1872
        %1896 = vst.msk [vmem:[#allocation3 + $0x8] sm:$0xf] %vm1893, %v1874
        %1897 = vst.msk [vmem:[#allocation3 + $0xc] sm:$0xf] %vm1893, %v1876
        %1898 = vst.msk [vmem:[#allocation3 + $0x10] sm:$0xf] %vm1893, %v1878
        %1899 = vst.msk [vmem:[#allocation3 + $0x14] sm:$0xf] %vm1893, %v1880
        %1900 = vst.msk [vmem:[#allocation3 + $0x18] sm:$0xf] %vm1893, %v1882
        %1901 = vst.msk [vmem:[#allocation3 + $0x1c] sm:$0xf] %vm1893, %v1884
        %v1902 = vld [vmem:[%s1141] sm:$0xf]
        %v1903 = vld [vmem:[%s1141 + $0x8] sm:$0xf]
        %v1904 = vld [vmem:[%s1141 + $0x10] sm:$0xf]
        %v1905 = vld [vmem:[%s1141 + $0x18] sm:$0xf]
        %v1906 = vld [vmem:[%s1141 + $0x20] sm:$0xf]
        %v1907 = vld [vmem:[%s1141 + $0x28] sm:$0xf]
        %v1908 = vld [vmem:[%s1141 + $0x30] sm:$0xf]
        %v1909 = vld [vmem:[%s1141 + $0x38] sm:$0xf]
        %1918 = vrot.lane.b32.xlu0 %v1902, 24
        %v1919 = vpop.permute.xlu0 %1918
        %1920 = vrot.lane.b32.xlu0 %v1903, 24
        %v1921 = vpop.permute.xlu0 %1920
        %1922 = vrot.lane.b32.xlu0 %v1904, 24
        %v1923 = vpop.permute.xlu0 %1922
        %1924 = vrot.lane.b32.xlu0 %v1905, 24
        %v1925 = vpop.permute.xlu0 %1924
        %1926 = vrot.lane.b32.xlu0 %v1906, 24
        %v1927 = vpop.permute.xlu0 %1926
        %1928 = vrot.lane.b32.xlu0 %v1907, 24
        %v1929 = vpop.permute.xlu0 %1928
        %1930 = vrot.lane.b32.xlu0 %v1908, 24
        %v1931 = vpop.permute.xlu0 %1930
        %1932 = vrot.lane.b32.xlu0 %v1909, 24
        %v1933 = vpop.permute.xlu0 %1932
        %vm1942 = vcmask 224448
        %1943 = vst.msk [vmem:[#allocation3] sm:$0xf] %vm1942, %v1919
        %1944 = vst.msk [vmem:[#allocation3 + $0x4] sm:$0xf] %vm1942, %v1921
        %1945 = vst.msk [vmem:[#allocation3 + $0x8] sm:$0xf] %vm1942, %v1923
        %1946 = vst.msk [vmem:[#allocation3 + $0xc] sm:$0xf] %vm1942, %v1925
        %1947 = vst.msk [vmem:[#allocation3 + $0x10] sm:$0xf] %vm1942, %v1927
        %1948 = vst.msk [vmem:[#allocation3 + $0x14] sm:$0xf] %vm1942, %v1929
        %1949 = vst.msk [vmem:[#allocation3 + $0x18] sm:$0xf] %vm1942, %v1931
        %1950 = vst.msk [vmem:[#allocation3 + $0x1c] sm:$0xf] %vm1942, %v1933
        %v1951 = vld [vmem:[%s907] sm:$0xf]
        %v1952 = vld [vmem:[%s907 + $0x4] sm:$0x1]
        %v1953 = vld [vmem:[%s907 + $0x8] sm:$0xf]
        %v1954 = vld [vmem:[%s907 + $0xc] sm:$0x1]
        %v1955 = vld [vmem:[%s907 + $0x10] sm:$0xf]
        %v1956 = vld [vmem:[%s907 + $0x14] sm:$0x1]
        %v1957 = vld [vmem:[%s907 + $0x18] sm:$0xf]
        %v1958 = vld [vmem:[%s907 + $0x1c] sm:$0x1]
        %v1959 = vld [vmem:[%s907 + $0x20] sm:$0xf]
        %v1960 = vld [vmem:[%s907 + $0x24] sm:$0x1]
        %v1961 = vld [vmem:[%s907 + $0x28] sm:$0xf]
        %v1962 = vld [vmem:[%s907 + $0x2c] sm:$0x1]
        %v1963 = vld [vmem:[%s907 + $0x30] sm:$0xf]
        %v1964 = vld [vmem:[%s907 + $0x34] sm:$0x1]
        %v1965 = vld [vmem:[%s907 + $0x38] sm:$0xf]
        %v1966 = vld [vmem:[%s907 + $0x3c] sm:$0x1]
        %v1968 = vshrl.u32 %v1951, 16
        %v1970 = vrot.slane %v1968, 4
        %v1971 = vshll.u32 %v1951, 16
        %v1973 = vrot.slane %v1971, 5
        %v1974 = vor.u32 %v1970, %v1973
        %v1975 = vrot.slane %v1974, 4
        %v1977 = vshll.u32 %v1952, 16
        %v1979 = vrot.slane %v1977, 5
        %v1980 = vsel %vm1224, %v1975, %v1979
        %v1982 = vshrl.u32 %v1953, 16
        %v1984 = vrot.slane %v1982, 4
        %v1985 = vshll.u32 %v1953, 16
        %v1987 = vrot.slane %v1985, 5
        %v1988 = vor.u32 %v1984, %v1987
        %v1989 = vrot.slane %v1988, 4
        %v1991 = vshll.u32 %v1954, 16
        %v1993 = vrot.slane %v1991, 5
        %v1994 = vsel %vm1224, %v1989, %v1993
        %v1996 = vshrl.u32 %v1955, 16
        %v1998 = vrot.slane %v1996, 4
        %v1999 = vshll.u32 %v1955, 16
        %v2001 = vrot.slane %v1999, 5
        %v2002 = vor.u32 %v1998, %v2001
        %v2003 = vrot.slane %v2002, 4
        %v2005 = vshll.u32 %v1956, 16
        %v2007 = vrot.slane %v2005, 5
        %v2008 = vsel %vm1224, %v2003, %v2007
        %v2010 = vshrl.u32 %v1957, 16
        %v2012 = vrot.slane %v2010, 4
        %v2013 = vshll.u32 %v1957, 16
        %v2015 = vrot.slane %v2013, 5
        %v2016 = vor.u32 %v2012, %v2015
        %v2017 = vrot.slane %v2016, 4
        %v2019 = vshll.u32 %v1958, 16
        %v2021 = vrot.slane %v2019, 5
        %v2022 = vsel %vm1224, %v2017, %v2021
        %v2024 = vshrl.u32 %v1959, 16
        %v2026 = vrot.slane %v2024, 4
        %v2027 = vshll.u32 %v1959, 16
        %v2029 = vrot.slane %v2027, 5
        %v2030 = vor.u32 %v2026, %v2029
        %v2031 = vrot.slane %v2030, 4
        %v2033 = vshll.u32 %v1960, 16
        %v2035 = vrot.slane %v2033, 5
        %v2036 = vsel %vm1224, %v2031, %v2035
        %v2038 = vshrl.u32 %v1961, 16
        %v2040 = vrot.slane %v2038, 4
        %v2041 = vshll.u32 %v1961, 16
        %v2043 = vrot.slane %v2041, 5
        %v2044 = vor.u32 %v2040, %v2043
        %v2045 = vrot.slane %v2044, 4
        %v2047 = vshll.u32 %v1962, 16
        %v2049 = vrot.slane %v2047, 5
        %v2050 = vsel %vm1224, %v2045, %v2049
        %v2052 = vshrl.u32 %v1963, 16
        %v2054 = vrot.slane %v2052, 4
        %v2055 = vshll.u32 %v1963, 16
        %v2057 = vrot.slane %v2055, 5
        %v2058 = vor.u32 %v2054, %v2057
        %v2059 = vrot.slane %v2058, 4
        %v2061 = vshll.u32 %v1964, 16
        %v2063 = vrot.slane %v2061, 5
        %v2064 = vsel %vm1224, %v2059, %v2063
        %v2066 = vshrl.u32 %v1965, 16
        %v2068 = vrot.slane %v2066, 4
        %v2069 = vshll.u32 %v1965, 16
        %v2071 = vrot.slane %v2069, 5
        %v2072 = vor.u32 %v2068, %v2071
        %v2073 = vrot.slane %v2072, 4
        %v2075 = vshll.u32 %v1966, 16
        %v2077 = vrot.slane %v2075, 5
        %v2078 = vsel %vm1224, %v2073, %v2077
        %2079 = vrot.lane.b32.xlu0 %v1980, 28
        %v2080 = vpop.permute.xlu0 %2079
        %2081 = vrot.lane.b32.xlu0 %v1994, 28
        %v2082 = vpop.permute.xlu0 %2081
        %2083 = vrot.lane.b32.xlu0 %v2008, 28
        %v2084 = vpop.permute.xlu0 %2083
        %2085 = vrot.lane.b32.xlu0 %v2022, 28
        %v2086 = vpop.permute.xlu0 %2085
        %2087 = vrot.lane.b32.xlu0 %v2036, 28
        %v2088 = vpop.permute.xlu0 %2087
        %2089 = vrot.lane.b32.xlu0 %v2050, 28
        %v2090 = vpop.permute.xlu0 %2089
        %2091 = vrot.lane.b32.xlu0 %v2064, 28
        %v2092 = vpop.permute.xlu0 %2091
        %2093 = vrot.lane.b32.xlu0 %v2078, 28
        %v2094 = vpop.permute.xlu0 %2093
        %vm2103 = vcmask 257248
        %2104 = vst.msk [vmem:[#allocation3] sm:$0xf] %vm2103, %v2080
        %2105 = vst.msk [vmem:[#allocation3 + $0x4] sm:$0xf] %vm2103, %v2082
        %2106 = vst.msk [vmem:[#allocation3 + $0x8] sm:$0xf] %vm2103, %v2084
        %2107 = vst.msk [vmem:[#allocation3 + $0xc] sm:$0xf] %vm2103, %v2086
        %2108 = vst.msk [vmem:[#allocation3 + $0x10] sm:$0xf] %vm2103, %v2088
        %2109 = vst.msk [vmem:[#allocation3 + $0x14] sm:$0xf] %vm2103, %v2090
        %2110 = vst.msk [vmem:[#allocation3 + $0x18] sm:$0xf] %vm2103, %v2092
        %2111 = vst.msk [vmem:[#allocation3 + $0x1c] sm:$0xf] %vm2103, %v2094
        %v2112 = vld [vmem:[%s1141] sm:$0xf]
        %v2113 = vld [vmem:[%s1141 + $0x4] sm:$0x1]
        %v2114 = vld [vmem:[%s1141 + $0x8] sm:$0xf]
        %v2115 = vld [vmem:[%s1141 + $0xc] sm:$0x1]
        %v2116 = vld [vmem:[%s1141 + $0x10] sm:$0xf]
        %v2117 = vld [vmem:[%s1141 + $0x14] sm:$0x1]
        %v2118 = vld [vmem:[%s1141 + $0x18] sm:$0xf]
        %v2119 = vld [vmem:[%s1141 + $0x1c] sm:$0x1]
        %v2120 = vld [vmem:[%s1141 + $0x20] sm:$0xf]
        %v2121 = vld [vmem:[%s1141 + $0x24] sm:$0x1]
        %v2122 = vld [vmem:[%s1141 + $0x28] sm:$0xf]
        %v2123 = vld [vmem:[%s1141 + $0x2c] sm:$0x1]
        %v2124 = vld [vmem:[%s1141 + $0x30] sm:$0xf]
        %v2125 = vld [vmem:[%s1141 + $0x34] sm:$0x1]
        %v2126 = vld [vmem:[%s1141 + $0x38] sm:$0xf]
        %v2127 = vld [vmem:[%s1141 + $0x3c] sm:$0x1]
        %v2129 = vshrl.u32 %v2112, 16
        %v2131 = vrot.slane %v2129, 4
        %v2132 = vshll.u32 %v2112, 16
        %v2134 = vrot.slane %v2132, 5
        %v2135 = vor.u32 %v2131, %v2134
        %v2136 = vrot.slane %v2135, 4
        %v2138 = vshll.u32 %v2113, 16
        %v2140 = vrot.slane %v2138, 5
        %v2141 = vsel %vm1224, %v2136, %v2140
        %v2143 = vshrl.u32 %v2114, 16
        %v2145 = vrot.slane %v2143, 4
        %v2146 = vshll.u32 %v2114, 16
        %v2148 = vrot.slane %v2146, 5
        %v2149 = vor.u32 %v2145, %v2148
        %v2150 = vrot.slane %v2149, 4
        %v2152 = vshll.u32 %v2115, 16
        %v2154 = vrot.slane %v2152, 5
        %v2155 = vsel %vm1224, %v2150, %v2154
        %v2157 = vshrl.u32 %v2116, 16
        %v2159 = vrot.slane %v2157, 4
        %v2160 = vshll.u32 %v2116, 16
        %v2162 = vrot.slane %v2160, 5
        %v2163 = vor.u32 %v2159, %v2162
        %v2164 = vrot.slane %v2163, 4
        %v2166 = vshll.u32 %v2117, 16
        %v2168 = vrot.slane %v2166, 5
        %v2169 = vsel %vm1224, %v2164, %v2168
        %v2171 = vshrl.u32 %v2118, 16
        %v2173 = vrot.slane %v2171, 4
        %v2174 = vshll.u32 %v2118, 16
        %v2176 = vrot.slane %v2174, 5
        %v2177 = vor.u32 %v2173, %v2176
        %v2178 = vrot.slane %v2177, 4
        %v2180 = vshll.u32 %v2119, 16
        %v2182 = vrot.slane %v2180, 5
        %v2183 = vsel %vm1224, %v2178, %v2182
        %v2185 = vshrl.u32 %v2120, 16
        %v2187 = vrot.slane %v2185, 4
        %v2188 = vshll.u32 %v2120, 16
        %v2190 = vrot.slane %v2188, 5
        %v2191 = vor.u32 %v2187, %v2190
        %v2192 = vrot.slane %v2191, 4
        %v2194 = vshll.u32 %v2121, 16
        %v2196 = vrot.slane %v2194, 5
        %v2197 = vsel %vm1224, %v2192, %v2196
        %v2199 = vshrl.u32 %v2122, 16
        %v2201 = vrot.slane %v2199, 4
        %v2202 = vshll.u32 %v2122, 16
        %v2204 = vrot.slane %v2202, 5
        %v2205 = vor.u32 %v2201, %v2204
        %v2206 = vrot.slane %v2205, 4
        %v2208 = vshll.u32 %v2123, 16
        %v2210 = vrot.slane %v2208, 5
        %v2211 = vsel %vm1224, %v2206, %v2210
        %v2213 = vshrl.u32 %v2124, 16
        %v2215 = vrot.slane %v2213, 4
        %v2216 = vshll.u32 %v2124, 16
        %v2218 = vrot.slane %v2216, 5
        %v2219 = vor.u32 %v2215, %v2218
        %v2220 = vrot.slane %v2219, 4
        %v2222 = vshll.u32 %v2125, 16
        %v2224 = vrot.slane %v2222, 5
        %v2225 = vsel %vm1224, %v2220, %v2224
        %v2227 = vshrl.u32 %v2126, 16
        %v2229 = vrot.slane %v2227, 4
        %v2230 = vshll.u32 %v2126, 16
        %v2232 = vrot.slane %v2230, 5
        %v2233 = vor.u32 %v2229, %v2232
        %v2234 = vrot.slane %v2233, 4
        %v2236 = vshll.u32 %v2127, 16
        %v2238 = vrot.slane %v2236, 5
        %v2239 = vsel %vm1224, %v2234, %v2238
        %2240 = vrot.lane.b32.xlu0 %v2141, 32
        %v2241 = vpop.permute.xlu0 %2240
        %2242 = vrot.lane.b32.xlu0 %v2155, 32
        %v2243 = vpop.permute.xlu0 %2242
        %2244 = vrot.lane.b32.xlu0 %v2169, 32
        %v2245 = vpop.permute.xlu0 %2244
        %2246 = vrot.lane.b32.xlu0 %v2183, 32
        %v2247 = vpop.permute.xlu0 %2246
        %2248 = vrot.lane.b32.xlu0 %v2197, 32
        %v2249 = vpop.permute.xlu0 %2248
        %2250 = vrot.lane.b32.xlu0 %v2211, 32
        %v2251 = vpop.permute.xlu0 %2250
        %2252 = vrot.lane.b32.xlu0 %v2225, 32
        %v2253 = vpop.permute.xlu0 %2252
        %2254 = vrot.lane.b32.xlu0 %v2239, 32
        %v2255 = vpop.permute.xlu0 %2254
        %vm2264 = vcmask 290048
        %2265 = vst.msk [vmem:[#allocation3] sm:$0xf] %vm2264, %v2241
        %2266 = vst.msk [vmem:[#allocation3 + $0x4] sm:$0xf] %vm2264, %v2243
        %2267 = vst.msk [vmem:[#allocation3 + $0x8] sm:$0xf] %vm2264, %v2245
        %2268 = vst.msk [vmem:[#allocation3 + $0xc] sm:$0xf] %vm2264, %v2247
        %2269 = vst.msk [vmem:[#allocation3 + $0x10] sm:$0xf] %vm2264, %v2249
        %2270 = vst.msk [vmem:[#allocation3 + $0x14] sm:$0xf] %vm2264, %v2251
        %2271 = vst.msk [vmem:[#allocation3 + $0x18] sm:$0xf] %vm2264, %v2253
        %2272 = vst.msk [vmem:[#allocation3 + $0x1c] sm:$0xf] %vm2264, %v2255
        %v2273 = vld [vmem:[#allocation3] sm:$0xf]
        %v2274 = vld [vmem:[#allocation3 + $0x4] sm:$0xf]
        %v2275 = vld [vmem:[#allocation3 + $0x8] sm:$0xf]
        %v2276 = vld [vmem:[#allocation3 + $0xc] sm:$0xf]
        %v2277 = vld [vmem:[#allocation3 + $0x10] sm:$0xf]
        %v2278 = vld [vmem:[#allocation3 + $0x14] sm:$0xf]
        %v2279 = vld [vmem:[#allocation3 + $0x18] sm:$0xf]
        %v2280 = vld [vmem:[#allocation3 + $0x1c] sm:$0xf]
        %v2281 = vld [vmem:[%s3] sm:$0xf]
        %v2282 = vld [vmem:[%s3 + $0x4] sm:$0xf]
        %v2283 = vld [vmem:[%s3 + $0x8] sm:$0xf]
        %v2284 = vld [vmem:[%s3 + $0xc] sm:$0xf]
        %v2285 = vld [vmem:[%s3 + $0x10] sm:$0x3]
        %v2294 = vunpack.c.l.b16 %v2273
        %v2295 = vunpack.c.l.b16 %v2274
        %v2296 = vunpack.c.l.b16 %v2275
        %v2297 = vunpack.c.l.b16 %v2276
        %v2298 = vunpack.c.l.b16 %v2277
        %v2299 = vunpack.c.l.b16 %v2278
        %v2300 = vunpack.c.l.b16 %v2279
        %v2301 = vunpack.c.l.b16 %v2280
        %v2302 = vpack.c.b16 %v2295, %v2294
        %v2303 = vpack.c.b16 %v2297, %v2296
        %v2304 = vpack.c.b16 %v2299, %v2298
        %v2305 = vpack.c.b16 %v2301, %v2300
        %v2311 = vunpack.c.l.b16 %v2281
        %v2312 = vunpack.c.l.b16 %v2282
        %v2313 = vunpack.c.l.b16 %v2283
        %v2314 = vunpack.c.l.b16 %v2284
        %v2315 = vunpack.c.l.b16 %v2285
        %v2316 = vpack.c.b16 %v2312, %v2311
        %v2317 = vpack.c.b16 %v2314, %v2313
        %v2318 = vpack.c.b16 %v2315, %v2315
        %vm2321 = vcmask 293888
        %v2323 = vsel %vm2321, %v2302, 0
        %v2326 = vsel %vm2321, %v2303, 0
        %v2329 = vsel %vm2321, %v2304, 0
        %v2332 = vsel %vm2321, %v2305, 0
        %vm2334 = vcmask 1041408
        %v2336 = vsel %vm2334, %v2318, 0
        %2338 = vmatprep.subr.bf16.mxu0 0
        %2339 = vmatpush1.bf16.msra.mxu0 %v2316
        %2340 = vmatprep.subr.bf16.mxu0 0
        %2341 = vmatpush1.bf16.msra.mxu0 %v2317
        %2342 = vmatprep.subr.bf16.mxu0 0
        %2343 = vmatpush1.bf16.msra.mxu0 %v2336
        %2344 = vmatprep.subr.bf16.mxu0 0
        %2345 = vmatpush1.bf16.msra.mxu0 0
        %2346 = vmatprep.subr.bf16.mxu0 0
        %2347 = vmatpush1.bf16.msra.mxu0 0
        %2348 = vmatprep.subr.bf16.mxu0 0
        %2349 = vmatpush1.bf16.msra.mxu0 0
        %2350 = vmatprep.subr.bf16.mxu0 0
        %2351 = vmatpush1.bf16.msra.mxu0 0
        %2352 = vmatprep.subr.bf16.mxu0 0
        %2353 = vmatpush1.bf16.msra.mxu0 0
        %2354 = vmatprep.subr.bf16.mxu0 0
        %2355 = vmatpush1.bf16.msra.mxu0 0
        %2356 = vmatprep.subr.bf16.mxu0 0
        %2357 = vmatpush1.bf16.msra.mxu0 0
        %2358 = vmatprep.subr.bf16.mxu0 0
        %2359 = vmatpush1.bf16.msra.mxu0 0
        %2360 = vmatprep.subr.bf16.mxu0 0
        %2361 = vmatpush1.bf16.msra.mxu0 0
        %2362 = vmatprep.subr.bf16.mxu0 0
        %2363 = vmatpush1.bf16.msra.mxu0 0
        %2364 = vmatprep.subr.bf16.mxu0 0
        %2365 = vmatpush1.bf16.msra.mxu0 0
        %2366 = vmatprep.subr.bf16.mxu0 0
        %2367 = vmatpush1.bf16.msra.mxu0 0
        %2368 = vmatprep.subr.bf16.mxu0 0
        %2369 = vmatpush1.bf16.msra.mxu0 0
        %2370 = vmatprep.mubr.bf16.mxu0 0
        %2371 = vmatmul.mubr.bf16.gmra.mrb[0].mxu0 %v2323
        %v2372 = vpop.f32.mrb[0].mxu0
        %v2373 = vadd.f32 0.0, %v2372
        %v2374 = vpop.f32.mrb[0].mxu0
        %v2375 = vpop.f32.mrb[0].mxu0
        %v2376 = vadd.f32 0.0, %v2375
        %v2377 = vpop.f32.mrb[0].mxu0
        %2378 = vmatprep.mubr.bf16.mxu0 0
        %2379 = vmatmul.mubr.bf16.gmra.mrb[0].mxu0 %v2326
        %v2380 = vpop.f32.mrb[0].mxu0
        %v2381 = vadd.f32 0.0, %v2380
        %v2382 = vpop.f32.mrb[0].mxu0
        %v2383 = vpop.f32.mrb[0].mxu0
        %v2384 = vadd.f32 0.0, %v2383
        %v2385 = vpop.f32.mrb[0].mxu0
        %2386 = vmatprep.mubr.bf16.mxu0 0
        %2387 = vmatmul.mubr.bf16.gmra.mrb[0].mxu0 %v2329
        %v2388 = vpop.f32.mrb[0].mxu0
        %v2389 = vadd.f32 0.0, %v2388
        %v2390 = vpop.f32.mrb[0].mxu0
        %v2391 = vpop.f32.mrb[0].mxu0
        %v2392 = vadd.f32 0.0, %v2391
        %v2393 = vpop.f32.mrb[0].mxu0
        %2394 = vmatprep.mubr.bf16.mxu0 0
        %2395 = vmatmul.mubr.bf16.gmra.mrb[0].mxu0 %v2332
        %v2396 = vpop.f32.mrb[0].mxu0
        %v2397 = vadd.f32 0.0, %v2396
        %v2398 = vpop.f32.mrb[0].mxu0
        %v2399 = vpop.f32.mrb[0].mxu0
        %v2400 = vadd.f32 0.0, %v2399
        %v2401 = vpop.f32.mrb[0].mxu0
        %2402 = vdwg.mxu0
        %vm2403 = vcmask 64512
        %v2404 = vsel %vm2403, %v2373, 0.0
        %v2405 = vsel %vm2403, %v2376, 0.0
        %v2406 = vadd.f32 %v2404, %v2405
        %v2407 = vsel %vm2403, %v2381, 0.0
        %v2408 = vadd.f32 %v2406, %v2407
        %v2409 = vsel %vm2403, %v2384, 0.0
        %v2410 = vadd.f32 %v2408, %v2409
        %v2411 = vsel %vm2403, %v2389, 0.0
        %v2412 = vadd.f32 %v2410, %v2411
        %v2413 = vsel %vm2403, %v2392, 0.0
        %v2414 = vadd.f32 %v2412, %v2413
        %v2415 = vsel %vm2403, %v2397, 0.0
        %v2416 = vadd.f32 %v2414, %v2415
        %v2417 = vsel %vm2403, %v2400, 0.0
        %v2418 = vadd.f32 %v2416, %v2417
        %v2419 = vrot.slane %v2418, 4
        %v2420 = vadd.f32 %v2418, %v2419
        %v2421 = vrot.slane %v2420, 2
        %v2422 = vadd.f32 %v2420, %v2421
        %v2423 = vrot.slane %v2422, 1
        %v2424 = vadd.f32 %v2422, %v2423
        %vm2425 = vcmask 57344
        %2426 = vst.msk [vmem:[%s228] sm:$0x1] %vm2425, %v2424
        %v2427 = vmul.f32 %v2373, %v2373
        %v2428 = vmul.f32 %v2376, %v2376
        %v2429 = vmul.f32 %v2381, %v2381
        %v2430 = vmul.f32 %v2384, %v2384
        %v2431 = vmul.f32 %v2389, %v2389
        %v2432 = vmul.f32 %v2392, %v2392
        %v2433 = vmul.f32 %v2397, %v2397
        %v2434 = vmul.f32 %v2400, %v2400
        %v2435 = vsel %vm2403, %v2427, 0.0
        %v2436 = vsel %vm2403, %v2428, 0.0
        %v2437 = vadd.f32 %v2435, %v2436
        %v2438 = vsel %vm2403, %v2429, 0.0
        %v2439 = vadd.f32 %v2437, %v2438
        %v2440 = vsel %vm2403, %v2430, 0.0
        %v2441 = vadd.f32 %v2439, %v2440
        %v2442 = vsel %vm2403, %v2431, 0.0
        %v2443 = vadd.f32 %v2441, %v2442
        %v2444 = vsel %vm2403, %v2432, 0.0
        %v2445 = vadd.f32 %v2443, %v2444
        %v2446 = vsel %vm2403, %v2433, 0.0
        %v2447 = vadd.f32 %v2445, %v2446
        %v2448 = vsel %vm2403, %v2434, 0.0
        %v2449 = vadd.f32 %v2447, %v2448
        %v2450 = vrot.slane %v2449, 4
        %v2451 = vadd.f32 %v2449, %v2450
        %v2452 = vrot.slane %v2451, 2
        %v2453 = vadd.f32 %v2451, %v2452
        %v2454 = vrot.slane %v2453, 1
        %v2455 = vadd.f32 %v2453, %v2454
        %2456 = vst.msk [vmem:[%s228 + $0x1] sm:$0x1] %vm2425, %v2455
        %v2457 = vpack.c.bf16 %v2373, %v2373
        %v2458 = vpack.c.bf16 %v2376, %v2376
        %v2459 = vpack.c.bf16 %v2381, %v2381
        %v2460 = vpack.c.bf16 %v2384, %v2384
        %v2461 = vpack.c.bf16 %v2389, %v2389
        %v2462 = vpack.c.bf16 %v2392, %v2392
        %v2463 = vpack.c.bf16 %v2397, %v2397
        %v2464 = vpack.c.bf16 %v2400, %v2400
        %vm2465 = vcmask 60416
        %2466 = vst.msk [vmem:[%s221] sm:$0xf] %vm2465, %v2457
        %2467 = vst.msk [vmem:[%s221 + $0x4] sm:$0xf] %vm2465, %v2458
        %2468 = vst.msk [vmem:[%s221 + $0x8] sm:$0xf] %vm2465, %v2459
        %2469 = vst.msk [vmem:[%s221 + $0xc] sm:$0xf] %vm2465, %v2460
        %2470 = vst.msk [vmem:[%s221 + $0x10] sm:$0xf] %vm2465, %v2461
        %2471 = vst.msk [vmem:[%s221 + $0x14] sm:$0xf] %vm2465, %v2462
        %2472 = vst.msk [vmem:[%s221 + $0x18] sm:$0xf] %vm2465, %v2463
        %2473 = vst.msk [vmem:[%s221 + $0x1c] sm:$0xf] %vm2465, %v2464
        %s2474 = sand.u32 %s120, 1
        %s2475 = scalar_lea.sflag [#allocation5], %s2474
        %s2476 = sand.u32 %s120, 1
        %s2477 = smul.addr %s2476, 32
        %s2478 = scalar_lea.vmem [#allocation4], %s2477
        %s2479 = sand.u32 %s146, 1
        %s2480 = scalar_lea.sflag [#allocation7], %s2479
        %s2481 = sand.u32 %s146, 1
        %s2482 = smul.addr %s2481, 2
        %s2483 = scalar_lea.vmem [#allocation6], %s2482
        // Predicated region
        $region37: #{tpu_custom_call.1} parent=35 // pred_check
          %p2484 = pneg %p130
        $region38: #{tpu_custom_call.1} parent=35 // pred_check_branch
          %2486 = sbr.rel (%p2484) target = $region40
        $region39: #{tpu_custom_call.1} parent=35 // pred_region
          %s2488 = ssub.s32 512, 512
          %2489 = vsyncadd %s2475, %s2488
          %s2490 = smul.addr %s23, 8
          %s2491 = smul.addr %s2490, 64
          %s2492 = scalar_lea.hbm %s4, %s2491
          %s2493 = sshll.u32 %s2478, 4
          %s2494 = int_to_ptr.vmem [resolvable:$true] %s2493
          %2499 = dma.vmem_to_hbm [thread:$0]  %s2494, 512, %s2492, %s2475, 64, 64, 4
        $region40: #{tpu_custom_call.1} parent=35 // pred_fallthru
          _
        // Predicated region
        $region41: #{tpu_custom_call.1} parent=35 // pred_check
          %p2500 = pneg %p156
        $region42: #{tpu_custom_call.1} parent=35 // pred_check_branch
          %2502 = sbr.rel (%p2500) target = $region44
        $region43: #{tpu_custom_call.1} parent=35 // pred_region
          %s2504 = ssub.s32 32, 32
          %2505 = vsyncadd %s2480, %s2504
          %s2506 = smul.addr %s23, 32
          %s2507 = scalar_lea.hbm %s5, %s2506
          %s2509 = sshll.u32 %s2483, 4
          %s2510 = int_to_ptr.vmem [resolvable:$true] %s2509
          %2512 = dma.vmem_to_hbm [thread:$0]  %s2510, 32, %s2507, %s2480
        $region44: #{tpu_custom_call.1} parent=35 // pred_fallthru
          _
      $region36: #{tpu_custom_call.1} parent=5 // pred_fallthru
        _
      %p2513 = scmp.le.s32.totalorder 2, %s18
      // Predicated region
      $region45: #{tpu_custom_call.1} parent=5 // pred_check
        %p2514 = pneg %p2513
      $region46: #{tpu_custom_call.1} parent=5 // pred_check_branch
        %2516 = sbr.rel (%p2514) target = $region48
      $region47: #{tpu_custom_call.1} parent=5 // pred_region
        %s2517 = ssub.s32 %s18, 2
        // Predicated region
        $region49: #{tpu_custom_call.1} parent=47 // pred_check
          %p2518 = pneg %p136
        $region50: #{tpu_custom_call.1} parent=47 // pred_check_branch
          %2520 = sbr.rel (%p2518) target = $region52
        $region51: #{tpu_custom_call.1} parent=47 // pred_region
          %s2521 = sand.u32 %s121, 1
          %s2522 = scalar_lea.sflag [#allocation5], %s2521
          %s2523 = sand.u32 %s121, 1
          %s2524 = smul.addr %s2523, 32
          %s2525 = scalar_lea.vmem [#allocation4], %s2524
          %2526 = dma.done %s2522, 512
        $region52: #{tpu_custom_call.1} parent=47 // pred_fallthru
          _
        // Predicated region
        $region53: #{tpu_custom_call.1} parent=47 // pred_check
          %p2527 = pneg %p162
        $region54: #{tpu_custom_call.1} parent=47 // pred_check_branch
          %2529 = sbr.rel (%p2527) target = $region56
        $region55: #{tpu_custom_call.1} parent=47 // pred_region
          %s2530 = sand.u32 %s147, 1
          %s2531 = scalar_lea.sflag [#allocation7], %s2530
          %s2532 = sand.u32 %s147, 1
          %s2533 = smul.addr %s2532, 2
          %s2534 = scalar_lea.vmem [#allocation6], %s2533
          %2535 = dma.done %s2531, 32
        $region56: #{tpu_custom_call.1} parent=47 // pred_fallthru
          _
      $region48: #{tpu_custom_call.1} parent=5 // pred_fallthru
        _
    $region6: #{tpu_custom_call.1} parent=1 // loop_footer
      %s22 = sadd.s32 1, %s18
    $region7: #{tpu_custom_call.1} parent=1 // loop_footer_branch
      %17 = sbr.rel target = $region3
    $region8: #{tpu_custom_call.1} parent=1 // loop_exit
      _
    %2536 = vsyncpa [#allocation5], 1
    %s2537 = scalar_lea.sflag [#allocation5], 1
    %2538 = vsyncpa %s2537, 1
    %2539 = vsyncpa [#allocation7], 1
    %s2540 = scalar_lea.sflag [#allocation7], 1
    %2541 = vsyncpa %s2540, 1

</llo_original>
